<compile_context>
chip_gen: v7x
topology: tpu7x:2x2x1
jax: 0.10.0
libtpu: 0.0.40
codegen_flags: <defaults>
</compile_context>

<pallas_src>
import functools
import math

import jax
import jax.numpy as jnp
from jax.experimental import pallas as pl
from jax.experimental.pallas import tpu as pltpu  # noqa: F401  (kept for TPU-specific tuning)


def _attention_kernel(x_ref, w_ref, b_ref, wo_ref, out_ref, attn_ref, *,
                      num_heads, batch, seq):
    """Fused q/k/v projection + multi-head attention, single invocation (no grid)."""
    H, B, L = num_heads, batch, seq
    hd = wo_ref.shape[1]
    E = wo_ref.shape[2]

    # One lane-dense MXU pass for all three streams and all heads:
    #   (B*L, 3F) @ (3F, 3E) + (1, 3E) -> (B*L, 3E), columns ordered [q | k | v].
    qkv = jnp.dot(x_ref[...], w_ref[...],
                  preferred_element_type=jnp.float32) + b_ref[...]

    # Gather per-(head, batch) tiles so heads*batch becomes the dot_general batch axis.
    # Only static slices + a leading-dim stack (always lowerable); index = h*B + b.
    def split_heads(stream):
        off = stream * E
        tiles = [qkv[b * L:(b + 1) * L, off + h * hd: off + (h + 1) * hd]
                 for h in range(H) for b in range(B)]          # each (L, hd)
        return jnp.stack(tiles, axis=0)                        # (H*B, L, hd)

    q = split_heads(0)
    k = split_heads(1)
    v = split_heads(2)

    # Scores / softmax batched over (head, batch): no cross-batch work, no mask.
    s = jnp.einsum("bqd,bkd->bqk", q, k,
                   preferred_element_type=jnp.float32)         # (H*B, L, L)
    m = jnp.max(s, axis=-1, keepdims=True)
    e = jnp.exp(s - m)
    denom = jnp.sum(e, axis=-1, keepdims=True)
    inv = pl.reciprocal(denom, approx=False)                   # exact; shared below
    p = e * inv                                                # (H*B, L, L)

    ctx = jnp.einsum("bqk,bkd->bqd", p, v,
                     preferred_element_type=jnp.float32)       # (H*B, L, hd)

    # Out-projection: per-head (hd -> E) blocks, accumulate over heads.
    out_acc = None
    attn_acc = None
    for h in range(H):
        ctx_h = ctx[h * B:(h + 1) * B]                         # (B, L, hd)  leading slice
        w_h = jnp.broadcast_to(wo_ref[h], (B, hd, E))          # (B, hd, E)
        o_h = jnp.einsum("bqd,bde->bqe", ctx_h, w_h,
                         preferred_element_type=jnp.float32)   # (B, L, E)
        p_h = p[h * B:(h + 1) * B]                             # (B, L, L)
        out_acc = o_h if out_acc is None else out_acc + o_h
        attn_acc = p_h if attn_acc is None else attn_acc + p_h

    out_ref[...] = out_acc.astype(out_ref.dtype)
    attn_ref[...] = (attn_acc * (1.0 / H)).astype(attn_ref.dtype)


def attention_module_forward(f1, f2, f3, params, *, num_heads):
    B, L, F = f1.shape
    assert f2.shape == (B, L, F) and f3.shape == (B, L, F), (
        "fused lane-concat path assumes matching q/k/v shapes")
    E = params["wiq"].shape[0]
    H = num_heads
    hd = E // H
    scale = 1.0 / math.sqrt(hd)

    # --- Wrapper-side fusion: Linear + MHA in-proj per stream, query scale folded in ---
    wq_f = (params["wq"] @ params["wiq"]) * scale              # (F, E)
    bq_f = (params["bq"] @ params["wiq"]) * scale              # (1, E)
    wk_f = params["wk"] @ params["wik"]
    bk_f = params["bk"] @ params["wik"]
    wv_f = params["wv"] @ params["wiv"]
    bv_f = params["bv"] @ params["wiv"]

    zero = jnp.zeros((F, E), jnp.float32)
    w_fused = jnp.concatenate([                                # (3F, 3E) block-diagonal
        jnp.concatenate([wq_f, zero, zero], axis=1),
        jnp.concatenate([zero, wk_f, zero], axis=1),
        jnp.concatenate([zero, zero, wv_f], axis=1),
    ], axis=0)
    b_fused = jnp.concatenate([bq_f, bk_f, bv_f], axis=1)      # (1, 3E)
    wo_h = params["wo"].reshape(H, hd, E)                      # per-head out-proj blocks

    x_cat = jnp.concatenate([f1, f2, f3], axis=-1).reshape(B * L, 3 * F)

    kernel = functools.partial(_attention_kernel, num_heads=H, batch=B, seq=L)

    # No grid: single invocation, whole-array VMEM refs, nothing to pipeline.
    out, attn_w = pl.pallas_call(
        kernel,
        out_shape=[
            jax.ShapeDtypeStruct((B, L, E), jnp.float32),
            jax.ShapeDtypeStruct((B, L, L), jnp.float32),
        ],
    )(x_cat, w_fused, b_fused, wo_h)
    return out, attn_w


def reference_forward(f1, f2, f3, params, *, num_heads):
    """Pure-JAX reference mirroring the PyTorch module (for a sanity check)."""
    q = f1 @ params["wq"] + params["bq"]
    k = f2 @ params["wk"] + params["bk"]
    v = f3 @ params["wv"] + params["bv"]
    q2 = q @ params["wiq"]
    k2 = k @ params["wik"]
    v2 = v @ params["wiv"]
    B, Lq, E = q2.shape
    Lk = k2.shape[1]
    hd = E // num_heads
    qh = q2.reshape(B, Lq, num_heads, hd).transpose(0, 2, 1, 3)
    kh = k2.reshape(B, Lk, num_heads, hd).transpose(0, 2, 1, 3)
    vh = v2.reshape(B, Lk, num_heads, hd).transpose(0, 2, 1, 3)
    s = jnp.einsum("bhqd,bhkd->bhqk", qh, kh) / math.sqrt(hd)
    p = jax.nn.softmax(s, axis=-1)
    ctx = jnp.einsum("bhqk,bhkd->bhqd", p, vh)
    ctx = ctx.transpose(0, 2, 1, 3).reshape(B, Lq, E)
    out = ctx @ params["wo"]
    attn_w = p.mean(axis=1)
    return out, attn_w


def init_params(key, feature_dim, embed_dim):
    ks = jax.random.split(key, 10)
    s_in = 1.0 / math.sqrt(feature_dim)
    s_e = 1.0 / math.sqrt(embed_dim)
    u = jax.random.uniform
    return {
        # query/key/value Linear (feature_dim -> embed_dim), stored as (in, out)
        "wq": u(ks[0], (feature_dim, embed_dim), jnp.float32, -s_in, s_in),
        "bq": u(ks[1], (1, embed_dim), jnp.float32, -s_in, s_in),
        "wk": u(ks[2], (feature_dim, embed_dim), jnp.float32, -s_in, s_in),
        "bk": u(ks[3], (1, embed_dim), jnp.float32, -s_in, s_in),
        "wv": u(ks[4], (feature_dim, embed_dim), jnp.float32, -s_in, s_in),
        "bv": u(ks[5], (1, embed_dim), jnp.float32, -s_in, s_in),
        # MultiheadAttention in-proj (split into q/k/v chunks) and out-proj, bias=False
        "wiq": u(ks[6], (embed_dim, embed_dim), jnp.float32, -s_e, s_e),
        "wik": u(ks[7], (embed_dim, embed_dim), jnp.float32, -s_e, s_e),
        "wiv": u(ks[8], (embed_dim, embed_dim), jnp.float32, -s_e, s_e),
        "wo": u(ks[9], (embed_dim, embed_dim), jnp.float32, -s_e, s_e),
    }


if __name__ == "__main__":
    B, L, FEATURE_DIM, EMBED_DIM, NUM_HEADS = 2, 8, 16, 32, 4

    key = jax.random.PRNGKey(0)
    k1, k2, k3, kp = jax.random.split(key, 4)
    features1 = jax.random.normal(k1, (B, L, FEATURE_DIM), jnp.float32)
    features2 = jax.random.normal(k2, (B, L, FEATURE_DIM), jnp.float32)
    features3 = jax.random.normal(k3, (B, L, FEATURE_DIM), jnp.float32)
    params = init_params(kp, FEATURE_DIM, EMBED_DIM)

    out, attn_w = attention_module_forward(
        features1, features2, features3, params, num_heads=NUM_HEADS)
    jax.block_until_ready((out, attn_w))

    ref_out, ref_w = reference_forward(
        features1, features2, features3, params, num_heads=NUM_HEADS)
    assert out.shape == (B, L, EMBED_DIM) and attn_w.shape == (B, L, L)
    # Exact reciprocal everywhere -> tight tolerances on both outputs.
    assert jnp.allclose(out, ref_out, atol=2e-4, rtol=2e-4)
    assert jnp.allclose(attn_w, ref_w, atol=5e-5, rtol=1e-4)

    print("KERNEL_OK")
</pallas_src>

<mosaic_0001>
module attributes {stable_mosaic.version = 11 : i64} {
  func.func @_attention_kernel(%arg0: memref<16x48xf32, #tpu.memory_space<vmem>>, %arg1: memref<48x96xf32, #tpu.memory_space<vmem>>, %arg2: memref<1x96xf32, #tpu.memory_space<vmem>>, %arg3: memref<4x8x32xf32, #tpu.memory_space<vmem>>, %arg4: memref<2x8x32xf32, #tpu.memory_space<vmem>>, %arg5: memref<2x8x8xf32, #tpu.memory_space<vmem>>) attributes {dimension_semantics = [], scalar_prefetch = 0 : i64, scratch_operands = 0 : i64, tpu.core_type = #tpu.core_type<tc>} {
    %c0 = arith.constant 0 : index
    %c0_0 = arith.constant 0 : index
    %0 = vector.load %arg0[%c0, %c0_0] : memref<16x48xf32, #tpu.memory_space<vmem>>, vector<16x48xf32>
    %c0_1 = arith.constant 0 : index
    %c0_2 = arith.constant 0 : index
    %1 = vector.load %arg1[%c0_1, %c0_2] : memref<48x96xf32, #tpu.memory_space<vmem>>, vector<48x96xf32>
    %cst = arith.constant dense<0.000000e+00> : vector<16x96xf32>
    %2 = tpu.matmul %0, %1, %cst {dimension_numbers = #tpu.dot_dimension_numbers<[1], [0], [0], [1], [0, 0, 1, 1], [], []>} : vector<16x48xf32>, vector<48x96xf32>, vector<16x96xf32> -> vector<16x96xf32>
    %c0_3 = arith.constant 0 : index
    %c0_4 = arith.constant 0 : index
    %3 = vector.load %arg2[%c0_3, %c0_4] : memref<1x96xf32, #tpu.memory_space<vmem>>, vector<1x96xf32>
    %4 = vector.broadcast %3 : vector<1x96xf32> to vector<16x96xf32>
    %5 = arith.addf %2, %4 : vector<16x96xf32>
    %6 = vector.extract_strided_slice %5 {offsets = [0, 0], sizes = [8, 8], strides = [1, 1]} : vector<16x96xf32> to vector<8x8xf32>
    %7 = vector.extract_strided_slice %5 {offsets = [8, 0], sizes = [8, 8], strides = [1, 1]} : vector<16x96xf32> to vector<8x8xf32>
    %8 = vector.extract_strided_slice %5 {offsets = [0, 8], sizes = [8, 8], strides = [1, 1]} : vector<16x96xf32> to vector<8x8xf32>
    %9 = vector.extract_strided_slice %5 {offsets = [8, 8], sizes = [8, 8], strides = [1, 1]} : vector<16x96xf32> to vector<8x8xf32>
    %10 = vector.extract_strided_slice %5 {offsets = [0, 16], sizes = [8, 8], strides = [1, 1]} : vector<16x96xf32> to vector<8x8xf32>
    %11 = vector.extract_strided_slice %5 {offsets = [8, 16], sizes = [8, 8], strides = [1, 1]} : vector<16x96xf32> to vector<8x8xf32>
    %12 = vector.extract_strided_slice %5 {offsets = [0, 24], sizes = [8, 8], strides = [1, 1]} : vector<16x96xf32> to vector<8x8xf32>
    %13 = vector.extract_strided_slice %5 {offsets = [8, 24], sizes = [8, 8], strides = [1, 1]} : vector<16x96xf32> to vector<8x8xf32>
    %14 = vector.shape_cast %6 : vector<8x8xf32> to vector<1x8x8xf32>
    %15 = vector.shape_cast %7 : vector<8x8xf32> to vector<1x8x8xf32>
    %16 = vector.shape_cast %8 : vector<8x8xf32> to vector<1x8x8xf32>
    %17 = vector.shape_cast %9 : vector<8x8xf32> to vector<1x8x8xf32>
    %18 = vector.shape_cast %10 : vector<8x8xf32> to vector<1x8x8xf32>
    %19 = vector.shape_cast %11 : vector<8x8xf32> to vector<1x8x8xf32>
    %20 = vector.shape_cast %12 : vector<8x8xf32> to vector<1x8x8xf32>
    %21 = vector.shape_cast %13 : vector<8x8xf32> to vector<1x8x8xf32>
    %22 = tpu.concatenate %14, %15, %16, %17, %18, %19, %20, %21 in 0 : vector<1x8x8xf32>, vector<1x8x8xf32>, vector<1x8x8xf32>, vector<1x8x8xf32>, vector<1x8x8xf32>, vector<1x8x8xf32>, vector<1x8x8xf32>, vector<1x8x8xf32> -> vector<8x8x8xf32>
    %23 = vector.extract_strided_slice %5 {offsets = [0, 32], sizes = [8, 8], strides = [1, 1]} : vector<16x96xf32> to vector<8x8xf32>
    %24 = vector.extract_strided_slice %5 {offsets = [8, 32], sizes = [8, 8], strides = [1, 1]} : vector<16x96xf32> to vector<8x8xf32>
    %25 = vector.extract_strided_slice %5 {offsets = [0, 40], sizes = [8, 8], strides = [1, 1]} : vector<16x96xf32> to vector<8x8xf32>
    %26 = vector.extract_strided_slice %5 {offsets = [8, 40], sizes = [8, 8], strides = [1, 1]} : vector<16x96xf32> to vector<8x8xf32>
    %27 = vector.extract_strided_slice %5 {offsets = [0, 48], sizes = [8, 8], strides = [1, 1]} : vector<16x96xf32> to vector<8x8xf32>
    %28 = vector.extract_strided_slice %5 {offsets = [8, 48], sizes = [8, 8], strides = [1, 1]} : vector<16x96xf32> to vector<8x8xf32>
    %29 = vector.extract_strided_slice %5 {offsets = [0, 56], sizes = [8, 8], strides = [1, 1]} : vector<16x96xf32> to vector<8x8xf32>
    %30 = vector.extract_strided_slice %5 {offsets = [8, 56], sizes = [8, 8], strides = [1, 1]} : vector<16x96xf32> to vector<8x8xf32>
    %31 = vector.shape_cast %23 : vector<8x8xf32> to vector<1x8x8xf32>
    %32 = vector.shape_cast %24 : vector<8x8xf32> to vector<1x8x8xf32>
    %33 = vector.shape_cast %25 : vector<8x8xf32> to vector<1x8x8xf32>
    %34 = vector.shape_cast %26 : vector<8x8xf32> to vector<1x8x8xf32>
    %35 = vector.shape_cast %27 : vector<8x8xf32> to vector<1x8x8xf32>
    %36 = vector.shape_cast %28 : vector<8x8xf32> to vector<1x8x8xf32>
    %37 = vector.shape_cast %29 : vector<8x8xf32> to vector<1x8x8xf32>
    %38 = vector.shape_cast %30 : vector<8x8xf32> to vector<1x8x8xf32>
    %39 = tpu.concatenate %31, %32, %33, %34, %35, %36, %37, %38 in 0 : vector<1x8x8xf32>, vector<1x8x8xf32>, vector<1x8x8xf32>, vector<1x8x8xf32>, vector<1x8x8xf32>, vector<1x8x8xf32>, vector<1x8x8xf32>, vector<1x8x8xf32> -> vector<8x8x8xf32>
    %40 = vector.extract_strided_slice %5 {offsets = [0, 64], sizes = [8, 8], strides = [1, 1]} : vector<16x96xf32> to vector<8x8xf32>
    %41 = vector.extract_strided_slice %5 {offsets = [8, 64], sizes = [8, 8], strides = [1, 1]} : vector<16x96xf32> to vector<8x8xf32>
    %42 = vector.extract_strided_slice %5 {offsets = [0, 72], sizes = [8, 8], strides = [1, 1]} : vector<16x96xf32> to vector<8x8xf32>
    %43 = vector.extract_strided_slice %5 {offsets = [8, 72], sizes = [8, 8], strides = [1, 1]} : vector<16x96xf32> to vector<8x8xf32>
    %44 = vector.extract_strided_slice %5 {offsets = [0, 80], sizes = [8, 8], strides = [1, 1]} : vector<16x96xf32> to vector<8x8xf32>
    %45 = vector.extract_strided_slice %5 {offsets = [8, 80], sizes = [8, 8], strides = [1, 1]} : vector<16x96xf32> to vector<8x8xf32>
    %46 = vector.extract_strided_slice %5 {offsets = [0, 88], sizes = [8, 8], strides = [1, 1]} : vector<16x96xf32> to vector<8x8xf32>
    %47 = vector.extract_strided_slice %5 {offsets = [8, 88], sizes = [8, 8], strides = [1, 1]} : vector<16x96xf32> to vector<8x8xf32>
    %48 = vector.shape_cast %40 : vector<8x8xf32> to vector<1x8x8xf32>
    %49 = vector.shape_cast %41 : vector<8x8xf32> to vector<1x8x8xf32>
    %50 = vector.shape_cast %42 : vector<8x8xf32> to vector<1x8x8xf32>
    %51 = vector.shape_cast %43 : vector<8x8xf32> to vector<1x8x8xf32>
    %52 = vector.shape_cast %44 : vector<8x8xf32> to vector<1x8x8xf32>
    %53 = vector.shape_cast %45 : vector<8x8xf32> to vector<1x8x8xf32>
    %54 = vector.shape_cast %46 : vector<8x8xf32> to vector<1x8x8xf32>
    %55 = vector.shape_cast %47 : vector<8x8xf32> to vector<1x8x8xf32>
    %56 = tpu.concatenate %48, %49, %50, %51, %52, %53, %54, %55 in 0 : vector<1x8x8xf32>, vector<1x8x8xf32>, vector<1x8x8xf32>, vector<1x8x8xf32>, vector<1x8x8xf32>, vector<1x8x8xf32>, vector<1x8x8xf32>, vector<1x8x8xf32> -> vector<8x8x8xf32>
    "tpu.trace_start"() <{level = 10 : i32, message = "bqd,bkd->bqk"}> : () -> ()
    %cst_5 = arith.constant dense<0.000000e+00> : vector<8x8x8xf32>
    %57 = tpu.matmul %22, %39, %cst_5 {dimension_numbers = #tpu.dot_dimension_numbers<[2], [2], [1], [1], [0, 0, 0, 1, 1, 1], [0], [0]>} : vector<8x8x8xf32>, vector<8x8x8xf32>, vector<8x8x8xf32> -> vector<8x8x8xf32>
    "tpu.trace_stop"() : () -> ()
    %cst_6 = arith.constant dense<0xFF800000> : vector<8x8xf32>
    %58 = vector.multi_reduction <maximumf>, %57, %cst_6 [2] : vector<8x8x8xf32> to vector<8x8xf32>
    %59 = vector.shape_cast %58 : vector<8x8xf32> to vector<8x8x1xf32>
    %60 = vector.broadcast %59 : vector<8x8x1xf32> to vector<8x8x8xf32>
    %61 = arith.subf %57, %60 : vector<8x8x8xf32>
    %62 = math.exp %61 : vector<8x8x8xf32>
    %cst_7 = arith.constant dense<0.000000e+00> : vector<8x8xf32>
    %63 = vector.multi_reduction <add>, %62, %cst_7 [2] : vector<8x8x8xf32> to vector<8x8xf32>
    %64 = vector.shape_cast %63 : vector<8x8xf32> to vector<8x8x1xf32>
    %65 = tpu.reciprocal %64 : vector<8x8x1xf32> -> vector<8x8x1xf32>
    %66 = vector.broadcast %65 : vector<8x8x1xf32> to vector<8x8x8xf32>
    %67 = arith.mulf %62, %66 : vector<8x8x8xf32>
    "tpu.trace_start"() <{level = 10 : i32, message = "bqk,bkd->bqd"}> : () -> ()
    %cst_8 = arith.constant dense<0.000000e+00> : vector<8x8x8xf32>
    %68 = tpu.matmul %67, %56, %cst_8 {dimension_numbers = #tpu.dot_dimension_numbers<[2], [1], [1], [2], [0, 0, 0, 1, 1, 2], [0], [0]>} : vector<8x8x8xf32>, vector<8x8x8xf32>, vector<8x8x8xf32> -> vector<8x8x8xf32>
    "tpu.trace_stop"() : () -> ()
    %69 = vector.extract_strided_slice %68 {offsets = [0, 0, 0], sizes = [2, 8, 8], strides = [1, 1, 1]} : vector<8x8x8xf32> to vector<2x8x8xf32>
    %c0_9 = arith.constant 0 : index
    %c0_10 = arith.constant 0 : index
    %c0_11 = arith.constant 0 : index
    %70 = vector.load %arg3[%c0_9, %c0_10, %c0_11] : memref<4x8x32xf32, #tpu.memory_space<vmem>>, vector<1x8x32xf32>
    %71 = vector.shape_cast %70 : vector<1x8x32xf32> to vector<8x32xf32>
    %72 = vector.shape_cast %71 : vector<8x32xf32> to vector<1x8x32xf32>
    %73 = vector.broadcast %72 : vector<1x8x32xf32> to vector<2x8x32xf32>
    "tpu.trace_start"() <{level = 10 : i32, message = "bqd,bde->bqe"}> : () -> ()
    %cst_12 = arith.constant dense<0.000000e+00> : vector<2x8x32xf32>
    %74 = tpu.matmul %69, %73, %cst_12 {dimension_numbers = #tpu.dot_dimension_numbers<[2], [1], [1], [2], [0, 0, 0, 1, 1, 2], [0], [0]>} : vector<2x8x8xf32>, vector<2x8x32xf32>, vector<2x8x32xf32> -> vector<2x8x32xf32>
    "tpu.trace_stop"() : () -> ()
    %75 = vector.extract_strided_slice %67 {offsets = [0, 0, 0], sizes = [2, 8, 8], strides = [1, 1, 1]} : vector<8x8x8xf32> to vector<2x8x8xf32>
    %76 = vector.extract_strided_slice %68 {offsets = [2, 0, 0], sizes = [2, 8, 8], strides = [1, 1, 1]} : vector<8x8x8xf32> to vector<2x8x8xf32>
    %c1 = arith.constant 1 : index
    %c0_13 = arith.constant 0 : index
    %c0_14 = arith.constant 0 : index
    %77 = vector.load %arg3[%c1, %c0_13, %c0_14] : memref<4x8x32xf32, #tpu.memory_space<vmem>>, vector<1x8x32xf32>
    %78 = vector.shape_cast %77 : vector<1x8x32xf32> to vector<8x32xf32>
    %79 = vector.shape_cast %78 : vector<8x32xf32> to vector<1x8x32xf32>
    %80 = vector.broadcast %79 : vector<1x8x32xf32> to vector<2x8x32xf32>
    "tpu.trace_start"() <{level = 10 : i32, message = "bqd,bde->bqe"}> : () -> ()
    %cst_15 = arith.constant dense<0.000000e+00> : vector<2x8x32xf32>
    %81 = tpu.matmul %76, %80, %cst_15 {dimension_numbers = #tpu.dot_dimension_numbers<[2], [1], [1], [2], [0, 0, 0, 1, 1, 2], [0], [0]>} : vector<2x8x8xf32>, vector<2x8x32xf32>, vector<2x8x32xf32> -> vector<2x8x32xf32>
    "tpu.trace_stop"() : () -> ()
    %82 = vector.extract_strided_slice %67 {offsets = [2, 0, 0], sizes = [2, 8, 8], strides = [1, 1, 1]} : vector<8x8x8xf32> to vector<2x8x8xf32>
    %83 = arith.addf %74, %81 : vector<2x8x32xf32>
    %84 = arith.addf %75, %82 : vector<2x8x8xf32>
    %85 = vector.extract_strided_slice %68 {offsets = [4, 0, 0], sizes = [2, 8, 8], strides = [1, 1, 1]} : vector<8x8x8xf32> to vector<2x8x8xf32>
    %c2 = arith.constant 2 : index
    %c0_16 = arith.constant 0 : index
    %c0_17 = arith.constant 0 : index
    %86 = vector.load %arg3[%c2, %c0_16, %c0_17] : memref<4x8x32xf32, #tpu.memory_space<vmem>>, vector<1x8x32xf32>
    %87 = vector.shape_cast %86 : vector<1x8x32xf32> to vector<8x32xf32>
    %88 = vector.shape_cast %87 : vector<8x32xf32> to vector<1x8x32xf32>
    %89 = vector.broadcast %88 : vector<1x8x32xf32> to vector<2x8x32xf32>
    "tpu.trace_start"() <{level = 10 : i32, message = "bqd,bde->bqe"}> : () -> ()
    %cst_18 = arith.constant dense<0.000000e+00> : vector<2x8x32xf32>
    %90 = tpu.matmul %85, %89, %cst_18 {dimension_numbers = #tpu.dot_dimension_numbers<[2], [1], [1], [2], [0, 0, 0, 1, 1, 2], [0], [0]>} : vector<2x8x8xf32>, vector<2x8x32xf32>, vector<2x8x32xf32> -> vector<2x8x32xf32>
    "tpu.trace_stop"() : () -> ()
    %91 = vector.extract_strided_slice %67 {offsets = [4, 0, 0], sizes = [2, 8, 8], strides = [1, 1, 1]} : vector<8x8x8xf32> to vector<2x8x8xf32>
    %92 = arith.addf %83, %90 : vector<2x8x32xf32>
    %93 = arith.addf %84, %91 : vector<2x8x8xf32>
    %94 = vector.extract_strided_slice %68 {offsets = [6, 0, 0], sizes = [2, 8, 8], strides = [1, 1, 1]} : vector<8x8x8xf32> to vector<2x8x8xf32>
    %c3 = arith.constant 3 : index
    %c0_19 = arith.constant 0 : index
    %c0_20 = arith.constant 0 : index
    %95 = vector.load %arg3[%c3, %c0_19, %c0_20] : memref<4x8x32xf32, #tpu.memory_space<vmem>>, vector<1x8x32xf32>
    %96 = vector.shape_cast %95 : vector<1x8x32xf32> to vector<8x32xf32>
    %97 = vector.shape_cast %96 : vector<8x32xf32> to vector<1x8x32xf32>
    %98 = vector.broadcast %97 : vector<1x8x32xf32> to vector<2x8x32xf32>
    "tpu.trace_start"() <{level = 10 : i32, message = "bqd,bde->bqe"}> : () -> ()
    %cst_21 = arith.constant dense<0.000000e+00> : vector<2x8x32xf32>
    %99 = tpu.matmul %94, %98, %cst_21 {dimension_numbers = #tpu.dot_dimension_numbers<[2], [1], [1], [2], [0, 0, 0, 1, 1, 2], [0], [0]>} : vector<2x8x8xf32>, vector<2x8x32xf32>, vector<2x8x32xf32> -> vector<2x8x32xf32>
    "tpu.trace_stop"() : () -> ()
    %100 = vector.extract_strided_slice %67 {offsets = [6, 0, 0], sizes = [2, 8, 8], strides = [1, 1, 1]} : vector<8x8x8xf32> to vector<2x8x8xf32>
    %101 = arith.addf %92, %99 : vector<2x8x32xf32>
    %102 = arith.addf %93, %100 : vector<2x8x8xf32>
    %c0_22 = arith.constant 0 : index
    %c0_23 = arith.constant 0 : index
    %c0_24 = arith.constant 0 : index
    %103 = vector.load %arg4[%c0_22, %c0_23, %c0_24] : memref<2x8x32xf32, #tpu.memory_space<vmem>>, vector<2x8x32xf32>
    tpu.vector_store %arg4[%c0_22, %c0_23, %c0_24], %101 {strides = array<i32>} : memref<2x8x32xf32, #tpu.memory_space<vmem>>, vector<2x8x32xf32>,
    %cst_25 = arith.constant 2.500000e-01 : f32
    %104 = vector.broadcast %cst_25 : f32 to vector<2x8x8xf32>
    %105 = arith.mulf %102, %104 : vector<2x8x8xf32>
    %c0_26 = arith.constant 0 : index
    %c0_27 = arith.constant 0 : index
    %c0_28 = arith.constant 0 : index
    %106 = vector.load %arg5[%c0_26, %c0_27, %c0_28] : memref<2x8x8xf32, #tpu.memory_space<vmem>>, vector<2x8x8xf32>
    tpu.vector_store %arg5[%c0_26, %c0_27, %c0_28], %105 {strides = array<i32>} : memref<2x8x8xf32, #tpu.memory_space<vmem>>, vector<2x8x8xf32>,
    return
  }
}

</mosaic_0001>

<llo_original>
// kernel: tpu_custom_call.1
$region0: #{tpu_custom_call.1}
  #allocation0 [shape = 'u32[]', space=smem, size = 0x4, offset = 0x4, fixed_abs, tag = 'smem constant byte address 0x4 - core index']
  #allocation1 [shape = 'u32[144,128]{1,0:T(1,128)}', space=vmem, size = 0x12000, scoped, tag = 'internal scratch']
  %s0 = inlined_call_operand.hbm [shape: f32[16,48], index: 0, kind: input, shape index: {}]
  %s1 = inlined_call_operand.hbm [shape: f32[48,96], index: 1, kind: input, shape index: {}]
  %s2 = inlined_call_operand.vmem [shape: f32[1,96], index: 2, kind: input, shape index: {}]
  %s3 = inlined_call_operand.hbm [shape: f32[4,8,32], index: 3, kind: input, shape index: {}]
  %s4 = inlined_call_operand.hbm [shape: f32[2,8,32], index: 4, kind: output, shape index: {0}]
  %s5 = inlined_call_operand.hbm [shape: f32[2,8,8], index: 5, kind: output, shape index: {1}]
  %6 = xla_tuple %s4, %s5
  %s7 = sld [smem:[#allocation0]]
  $region46: #{tpu_custom_call.1} parent=0
    _
  %s9 = ssub.s32 1, %s7
  %s10 = scalar_select 0, %s9, %s7
  $region1: #{tpu_custom_call.1} parent=0
    #allocation2 [shape = 'u8[8192]{0}', space=vmem, size = 0x2000, scoped, tag = 'input window, operand 0, single buffered']
    #allocation3 [shape = 's32[1]{0}', space=sflag, size = 0x4, scoped, tag = 'scoped memory for tpu_custom_call.1']
    #allocation4 [shape = 's32[1]{0}', space=sflag, size = 0x4, scoped, tag = 'scoped memory for tpu_custom_call.1']
    #allocation5 [shape = 'u8[24576]{0}', space=vmem, size = 0x6000, scoped, tag = 'input window, operand 1, single buffered']
    #allocation6 [shape = 's32[1]{0}', space=sflag, size = 0x4, scoped, tag = 'scoped memory for tpu_custom_call.1']
    #allocation7 [shape = 'u8[16384]{0}', space=vmem, size = 0x4000, scoped, tag = 'input window, operand 3, single buffered']
    #allocation8 [shape = 'u8[8192]{0}', space=vmem, size = 0x2000, scoped, tag = 'output window, operand 0, single buffered']
    #allocation9 [shape = 'u8[8192]{0}', space=vmem, size = 0x2000, scoped, tag = 'output window, operand 1, single buffered']
    #allocation10 [shape = 's32[1]{0}', space=sflag, size = 0x4, scoped, tag = 'scoped memory for tpu_custom_call.1']
    %11 = vsyncpa [#allocation3], 0
    %12 = vsyncpa [#allocation6], 0
    %13 = vsyncpa [#allocation4], 0
    %14 = vsyncpa [#allocation10], 0
    // Predicated region
    $region2: #{tpu_custom_call.1} parent=1 // pred_check
      _
    $region3: #{tpu_custom_call.1} parent=1 // pred_check_branch
      %16 = sbr.rel (0) target = $region5
    $region4: #{tpu_custom_call.1} parent=1 // pred_region
      %s18 = ssub.s32 256, 256
      %19 = vsyncadd [#allocation3], %s18
      %s20 = sshll.u32 [#allocation2], 4
      %s21 = int_to_ptr.vmem [resolvable:$true] %s20
      %26 = dma.hbm_to_vmem [thread:$0]  %s0, 256, %s21, [#allocation3], 128, 128, 8
    $region5: #{tpu_custom_call.1} parent=1 // pred_fallthru
      _
    // Predicated region
    $region6: #{tpu_custom_call.1} parent=1 // pred_check
      _
    $region7: #{tpu_custom_call.1} parent=1 // pred_check_branch
      %28 = sbr.rel (0) target = $region9
    $region8: #{tpu_custom_call.1} parent=1 // pred_region
      %s30 = ssub.s32 768, 768
      %31 = vsyncadd [#allocation6], %s30
      %s32 = sshll.u32 [#allocation5], 4
      %s33 = int_to_ptr.vmem [resolvable:$true] %s32
      %38 = dma.hbm_to_vmem [thread:$0]  %s1, 768, %s33, [#allocation6], 128, 128, 8
    $region9: #{tpu_custom_call.1} parent=1 // pred_fallthru
      _
    // Predicated region
    $region10: #{tpu_custom_call.1} parent=1 // pred_check
      _
    $region11: #{tpu_custom_call.1} parent=1 // pred_check_branch
      %40 = sbr.rel (0) target = $region13
    $region12: #{tpu_custom_call.1} parent=1 // pred_region
      _
    $region13: #{tpu_custom_call.1} parent=1 // pred_fallthru
      _
    // Predicated region
    $region14: #{tpu_custom_call.1} parent=1 // pred_check
      _
    $region15: #{tpu_custom_call.1} parent=1 // pred_check_branch
      %42 = sbr.rel (0) target = $region17
    $region16: #{tpu_custom_call.1} parent=1 // pred_region
      %s44 = ssub.s32 512, 512
      %45 = vsyncadd [#allocation6], %s44
      %s46 = sshll.u32 [#allocation7], 4
      %s47 = int_to_ptr.vmem [resolvable:$true] %s46
      %52 = dma.hbm_to_vmem [thread:$0]  %s3, 512, %s47, [#allocation6], 128, 128, 8
    $region17: #{tpu_custom_call.1} parent=1 // pred_fallthru
      _
    // Predicated region
    $region18: #{tpu_custom_call.1} parent=1 // pred_check
      _
    $region19: #{tpu_custom_call.1} parent=1 // pred_check_branch
      %54 = sbr.rel (0) target = $region21
    $region20: #{tpu_custom_call.1} parent=1 // pred_region
      %55 = dma.done [#allocation3], 256
    $region21: #{tpu_custom_call.1} parent=1 // pred_fallthru
      _
    // Predicated region
    $region22: #{tpu_custom_call.1} parent=1 // pred_check
      _
    $region23: #{tpu_custom_call.1} parent=1 // pred_check_branch
      %57 = sbr.rel (0) target = $region25
    $region24: #{tpu_custom_call.1} parent=1 // pred_region
      %58 = dma.done [#allocation6], 768
    $region25: #{tpu_custom_call.1} parent=1 // pred_fallthru
      _
    // Predicated region
    $region26: #{tpu_custom_call.1} parent=1 // pred_check
      _
    $region27: #{tpu_custom_call.1} parent=1 // pred_check_branch
      %60 = sbr.rel (0) target = $region29
    $region28: #{tpu_custom_call.1} parent=1 // pred_region
      %61 = dma.done [#allocation6], 512
    $region29: #{tpu_custom_call.1} parent=1 // pred_fallthru
      _
    %v62 = vld [vmem:[#allocation2] sm:$0xff]
    %v63 = vld [vmem:[#allocation2 + $0x8] sm:$0xff]
    %v64 = vld [vmem:[#allocation5] sm:$0xff]
    %v65 = vld [vmem:[#allocation5 + $0x8] sm:$0xff]
    %v66 = vld [vmem:[#allocation5 + $0x10] sm:$0xff]
    %v67 = vld [vmem:[#allocation5 + $0x18] sm:$0xff]
    %v68 = vld [vmem:[#allocation5 + $0x20] sm:$0xff]
    %v69 = vld [vmem:[#allocation5 + $0x28] sm:$0xff]
    %v70 = vld [vmem:[%s2] sm:$0x1]
    %v72 = vlaneseq
    %v73 = vshrl.u32 %v72, 7
    %v74 = vsub.s32 0, %v73
    %v75 = vrot.slane %v70, %v74
    %vm77 = vcmask 392192
    %v79 = vsel %vm77, %v62, 0
    %v82 = vsel %vm77, %v63, 0
    %84 = vmatprep.subr.mxu0 0.0
    %85 = vmatpush1.msra.mxu0 %v64
    %86 = vmatprep.subr.mxu0 0.0
    %87 = vmatpush1.msra.mxu0 %v65
    %88 = vmatprep.subr.mxu0 0.0
    %89 = vmatpush1.msra.mxu0 %v66
    %90 = vmatprep.subr.mxu0 0.0
    %91 = vmatpush1.msra.mxu0 %v67
    %92 = vmatprep.subr.mxu0 0.0
    %93 = vmatpush1.msra.mxu0 %v68
    %94 = vmatprep.subr.mxu0 0.0
    %95 = vmatpush1.msra.mxu0 %v69
    %96 = vmatprep.subr.mxu0 0.0
    %97 = vmatpush1.msra.mxu0 0.0
    %98 = vmatprep.subr.mxu0 0.0
    %99 = vmatpush1.msra.mxu0 0.0
    %100 = vmatprep.subr.mxu0 0.0
    %101 = vmatpush1.msra.mxu0 0.0
    %102 = vmatprep.subr.mxu0 0.0
    %103 = vmatpush1.msra.mxu0 0.0
    %104 = vmatprep.subr.mxu0 0.0
    %105 = vmatpush1.msra.mxu0 0.0
    %106 = vmatprep.subr.mxu0 0.0
    %107 = vmatpush1.msra.mxu0 0.0
    %108 = vmatprep.subr.mxu0 0.0
    %109 = vmatpush1.msra.mxu0 0.0
    %110 = vmatprep.subr.mxu0 0.0
    %111 = vmatpush1.msra.mxu0 0.0
    %112 = vmatprep.subr.mxu0 0.0
    %113 = vmatpush1.msra.mxu0 0.0
    %114 = vmatprep.subr.mxu0 0.0
    %115 = vmatpush1.msra.mxu0 0.0
    %116 = vmatprep.subr.mxu0 0.0
    %117 = vmatpush1.msra.mxu0 0.0
    %118 = vmatprep.subr.mxu0 0.0
    %119 = vmatpush1.msra.mxu0 0.0
    %120 = vmatprep.subr.mxu0 0.0
    %121 = vmatpush1.msra.mxu0 0.0
    %122 = vmatprep.subr.mxu0 0.0
    %123 = vmatpush1.msra.mxu0 0.0
    %124 = vmatprep.subr.mxu0 0.0
    %125 = vmatpush1.msra.mxu0 0.0
    %126 = vmatprep.subr.mxu0 0.0
    %127 = vmatpush1.msra.mxu0 0.0
    %128 = vmatprep.subr.mxu0 0.0
    %129 = vmatpush1.msra.mxu0 0.0
    %130 = vmatprep.subr.mxu0 0.0
    %131 = vmatpush1.msra.mxu0 0.0
    %132 = vmatprep.subr.mxu0 0.0
    %133 = vmatpush1.msra.mxu0 0.0
    %134 = vmatprep.subr.mxu0 0.0
    %135 = vmatpush1.msra.mxu0 0.0
    %136 = vmatprep.subr.mxu0 0.0
    %137 = vmatpush1.msra.mxu0 0.0
    %138 = vmatprep.subr.mxu0 0.0
    %139 = vmatpush1.msra.mxu0 0.0
    %140 = vmatprep.subr.mxu0 0.0
    %141 = vmatpush1.msra.mxu0 0.0
    %142 = vmatprep.subr.mxu0 0.0
    %143 = vmatpush1.msra.mxu0 0.0
    %144 = vmatprep.subr.mxu0 0.0
    %145 = vmatpush1.msra.mxu0 0.0
    %146 = vmatprep.subr.mxu0 0.0
    %147 = vmatpush1.msra.mxu0 0.0
    %148 = vmatprep.mubr.f32.mxu0 0.0
    %149 = vmatmul.mubr.f32.gmra.mrb[0].mxu0 %v79
    %v150 = vpop.f32.mrb[0].mxu0
    %v151 = vadd.f32 %v75, %v150
    %v152 = vpop.f32.mrb[0].mxu0
    %153 = vmatprep.mubr.f32.mxu0 0.0
    %154 = vmatmul.mubr.f32.gmra.mrb[0].mxu0 %v82
    %v155 = vpop.f32.mrb[0].mxu0
    %v156 = vadd.f32 %v75, %v155
    %v157 = vpop.f32.mrb[0].mxu0
    %158 = vdwg.mxu0
    %160 = vrot.lane.b32.xlu0 %v151, 120
    %v161 = vpop.permute.xlu0 %160
    %163 = vrot.lane.b32.xlu0 %v156, 120
    %v164 = vpop.permute.xlu0 %163
    %165 = vrot.lane.b32.xlu0 %v151, 112
    %v166 = vpop.permute.xlu0 %165
    %167 = vrot.lane.b32.xlu0 %v156, 112
    %v168 = vpop.permute.xlu0 %167
    %169 = vrot.lane.b32.xlu0 %v151, 104
    %v170 = vpop.permute.xlu0 %169
    %171 = vrot.lane.b32.xlu0 %v156, 104
    %v172 = vpop.permute.xlu0 %171
    %173 = vrot.lane.b32.xlu0 %v151, 96
    %v174 = vpop.permute.xlu0 %173
    %vm175 = vcmask 64512
    %v176 = vsel %vm175, %v151, 0
    %v178 = vsel %vm175, %v174, 0
    %180 = vmatprep.subr.mxu0 0.0
    %181 = vmatpush1.xpose.msra.mxu0 %v178
    %182 = vmatprep.subr.mxu0 0.0
    %183 = vmatpush1.xpose.msra.mxu0 0.0
    %184 = vmatprep.subr.mxu0 0.0
    %185 = vmatpush1.xpose.msra.mxu0 0.0
    %186 = vmatprep.subr.mxu0 0.0
    %187 = vmatpush1.xpose.msra.mxu0 0.0
    %188 = vmatprep.subr.mxu0 0.0
    %189 = vmatpush1.xpose.msra.mxu0 0.0
    %190 = vmatprep.subr.mxu0 0.0
    %191 = vmatpush1.xpose.msra.mxu0 0.0
    %192 = vmatprep.subr.mxu0 0.0
    %193 = vmatpush1.xpose.msra.mxu0 0.0
    %194 = vmatprep.subr.mxu0 0.0
    %195 = vmatpush1.xpose.msra.mxu0 0.0
    %196 = vmatprep.subr.mxu0 0.0
    %197 = vmatpush1.xpose.msra.mxu0 0.0
    %198 = vmatprep.subr.mxu0 0.0
    %199 = vmatpush1.xpose.msra.mxu0 0.0
    %200 = vmatprep.subr.mxu0 0.0
    %201 = vmatpush1.xpose.msra.mxu0 0.0
    %202 = vmatprep.subr.mxu0 0.0
    %203 = vmatpush1.xpose.msra.mxu0 0.0
    %204 = vmatprep.subr.mxu0 0.0
    %205 = vmatpush1.xpose.msra.mxu0 0.0
    %206 = vmatprep.subr.mxu0 0.0
    %207 = vmatpush1.xpose.msra.mxu0 0.0
    %208 = vmatprep.subr.mxu0 0.0
    %209 = vmatpush1.xpose.msra.mxu0 0.0
    %210 = vmatprep.subr.mxu0 0.0
    %211 = vmatpush1.xpose.msra.mxu0 0.0
    %212 = vmatprep.subr.mxu0 0.0
    %213 = vmatpush1.xpose.msra.mxu0 0.0
    %214 = vmatprep.subr.mxu0 0.0
    %215 = vmatpush1.xpose.msra.mxu0 0.0
    %216 = vmatprep.subr.mxu0 0.0
    %217 = vmatpush1.xpose.msra.mxu0 0.0
    %218 = vmatprep.subr.mxu0 0.0
    %219 = vmatpush1.xpose.msra.mxu0 0.0
    %220 = vmatprep.subr.mxu0 0.0
    %221 = vmatpush1.xpose.msra.mxu0 0.0
    %222 = vmatprep.subr.mxu0 0.0
    %223 = vmatpush1.xpose.msra.mxu0 0.0
    %224 = vmatprep.subr.mxu0 0.0
    %225 = vmatpush1.xpose.msra.mxu0 0.0
    %226 = vmatprep.subr.mxu0 0.0
    %227 = vmatpush1.xpose.msra.mxu0 0.0
    %228 = vmatprep.subr.mxu0 0.0
    %229 = vmatpush1.xpose.msra.mxu0 0.0
    %230 = vmatprep.subr.mxu0 0.0
    %231 = vmatpush1.xpose.msra.mxu0 0.0
    %232 = vmatprep.subr.mxu0 0.0
    %233 = vmatpush1.xpose.msra.mxu0 0.0
    %234 = vmatprep.subr.mxu0 0.0
    %235 = vmatpush1.xpose.msra.mxu0 0.0
    %236 = vmatprep.subr.mxu0 0.0
    %237 = vmatpush1.xpose.msra.mxu0 0.0
    %238 = vmatprep.subr.mxu0 0.0
    %239 = vmatpush1.xpose.msra.mxu0 0.0
    %240 = vmatprep.subr.mxu0 0.0
    %241 = vmatpush1.xpose.msra.mxu0 0.0
    %242 = vmatprep.subr.mxu0 0.0
    %243 = vmatpush1.xpose.msra.mxu0 0.0
    %244 = vmatprep.mubr.f32.mxu0 0.0
    %245 = vmatmul.mubr.f32.gmra.mrb[0].mxu0 %v176
    %v246 = vpop.f32.mrb[0].mxu0
    %v247 = vadd.f32 0.0, %v246
    %v248 = vpop.f32.mrb[0].mxu0
    %249 = vdwg.mxu0
    %250 = vrot.lane.b32.xlu0 %v156, 96
    %v251 = vpop.permute.xlu0 %250
    %v252 = vsel %vm175, %v156, 0
    %v254 = vsel %vm175, %v251, 0
    %256 = vmatprep.subr.mxu0 0.0
    %257 = vmatpush1.xpose.msra.mxu0 %v254
    %258 = vmatprep.subr.mxu0 0.0
    %259 = vmatpush1.xpose.msra.mxu0 0.0
    %260 = vmatprep.subr.mxu0 0.0
    %261 = vmatpush1.xpose.msra.mxu0 0.0
    %262 = vmatprep.subr.mxu0 0.0
    %263 = vmatpush1.xpose.msra.mxu0 0.0
    %264 = vmatprep.subr.mxu0 0.0
    %265 = vmatpush1.xpose.msra.mxu0 0.0
    %266 = vmatprep.subr.mxu0 0.0
    %267 = vmatpush1.xpose.msra.mxu0 0.0
    %268 = vmatprep.subr.mxu0 0.0
    %269 = vmatpush1.xpose.msra.mxu0 0.0
    %270 = vmatprep.subr.mxu0 0.0
    %271 = vmatpush1.xpose.msra.mxu0 0.0
    %272 = vmatprep.subr.mxu0 0.0
    %273 = vmatpush1.xpose.msra.mxu0 0.0
    %274 = vmatprep.subr.mxu0 0.0
    %275 = vmatpush1.xpose.msra.mxu0 0.0
    %276 = vmatprep.subr.mxu0 0.0
    %277 = vmatpush1.xpose.msra.mxu0 0.0
    %278 = vmatprep.subr.mxu0 0.0
    %279 = vmatpush1.xpose.msra.mxu0 0.0
    %280 = vmatprep.subr.mxu0 0.0
    %281 = vmatpush1.xpose.msra.mxu0 0.0
    %282 = vmatprep.subr.mxu0 0.0
    %283 = vmatpush1.xpose.msra.mxu0 0.0
    %284 = vmatprep.subr.mxu0 0.0
    %285 = vmatpush1.xpose.msra.mxu0 0.0
    %286 = vmatprep.subr.mxu0 0.0
    %287 = vmatpush1.xpose.msra.mxu0 0.0
    %288 = vmatprep.subr.mxu0 0.0
    %289 = vmatpush1.xpose.msra.mxu0 0.0
    %290 = vmatprep.subr.mxu0 0.0
    %291 = vmatpush1.xpose.msra.mxu0 0.0
    %292 = vmatprep.subr.mxu0 0.0
    %293 = vmatpush1.xpose.msra.mxu0 0.0
    %294 = vmatprep.subr.mxu0 0.0
    %295 = vmatpush1.xpose.msra.mxu0 0.0
    %296 = vmatprep.subr.mxu0 0.0
    %297 = vmatpush1.xpose.msra.mxu0 0.0
    %298 = vmatprep.subr.mxu0 0.0
    %299 = vmatpush1.xpose.msra.mxu0 0.0
    %300 = vmatprep.subr.mxu0 0.0
    %301 = vmatpush1.xpose.msra.mxu0 0.0
    %302 = vmatprep.subr.mxu0 0.0
    %303 = vmatpush1.xpose.msra.mxu0 0.0
    %304 = vmatprep.subr.mxu0 0.0
    %305 = vmatpush1.xpose.msra.mxu0 0.0
    %306 = vmatprep.subr.mxu0 0.0
    %307 = vmatpush1.xpose.msra.mxu0 0.0
    %308 = vmatprep.subr.mxu0 0.0
    %309 = vmatpush1.xpose.msra.mxu0 0.0
    %310 = vmatprep.subr.mxu0 0.0
    %311 = vmatpush1.xpose.msra.mxu0 0.0
    %312 = vmatprep.subr.mxu0 0.0
    %313 = vmatpush1.xpose.msra.mxu0 0.0
    %314 = vmatprep.subr.mxu0 0.0
    %315 = vmatpush1.xpose.msra.mxu0 0.0
    %316 = vmatprep.subr.mxu0 0.0
    %317 = vmatpush1.xpose.msra.mxu0 0.0
    %318 = vmatprep.subr.mxu0 0.0
    %319 = vmatpush1.xpose.msra.mxu0 0.0
    %320 = vmatprep.mubr.f32.mxu0 0.0
    %321 = vmatmul.mubr.f32.gmra.mrb[0].mxu0 %v252
    %v322 = vpop.f32.mrb[0].mxu0
    %v323 = vadd.f32 0.0, %v322
    %v324 = vpop.f32.mrb[0].mxu0
    %325 = vdwg.mxu0
    %326 = vrot.lane.b32.xlu0 %v161, 96
    %v327 = vpop.permute.xlu0 %326
    %v328 = vsel %vm175, %v161, 0
    %v330 = vsel %vm175, %v327, 0
    %332 = vmatprep.subr.mxu0 0.0
    %333 = vmatpush1.xpose.msra.mxu0 %v330
    %334 = vmatprep.subr.mxu0 0.0
    %335 = vmatpush1.xpose.msra.mxu0 0.0
    %336 = vmatprep.subr.mxu0 0.0
    %337 = vmatpush1.xpose.msra.mxu0 0.0
    %338 = vmatprep.subr.mxu0 0.0
    %339 = vmatpush1.xpose.msra.mxu0 0.0
    %340 = vmatprep.subr.mxu0 0.0
    %341 = vmatpush1.xpose.msra.mxu0 0.0
    %342 = vmatprep.subr.mxu0 0.0
    %343 = vmatpush1.xpose.msra.mxu0 0.0
    %344 = vmatprep.subr.mxu0 0.0
    %345 = vmatpush1.xpose.msra.mxu0 0.0
    %346 = vmatprep.subr.mxu0 0.0
    %347 = vmatpush1.xpose.msra.mxu0 0.0
    %348 = vmatprep.subr.mxu0 0.0
    %349 = vmatpush1.xpose.msra.mxu0 0.0
    %350 = vmatprep.subr.mxu0 0.0
    %351 = vmatpush1.xpose.msra.mxu0 0.0
    %352 = vmatprep.subr.mxu0 0.0
    %353 = vmatpush1.xpose.msra.mxu0 0.0
    %354 = vmatprep.subr.mxu0 0.0
    %355 = vmatpush1.xpose.msra.mxu0 0.0
    %356 = vmatprep.subr.mxu0 0.0
    %357 = vmatpush1.xpose.msra.mxu0 0.0
    %358 = vmatprep.subr.mxu0 0.0
    %359 = vmatpush1.xpose.msra.mxu0 0.0
    %360 = vmatprep.subr.mxu0 0.0
    %361 = vmatpush1.xpose.msra.mxu0 0.0
    %362 = vmatprep.subr.mxu0 0.0
    %363 = vmatpush1.xpose.msra.mxu0 0.0
    %364 = vmatprep.subr.mxu0 0.0
    %365 = vmatpush1.xpose.msra.mxu0 0.0
    %366 = vmatprep.subr.mxu0 0.0
    %367 = vmatpush1.xpose.msra.mxu0 0.0
    %368 = vmatprep.subr.mxu0 0.0
    %369 = vmatpush1.xpose.msra.mxu0 0.0
    %370 = vmatprep.subr.mxu0 0.0
    %371 = vmatpush1.xpose.msra.mxu0 0.0
    %372 = vmatprep.subr.mxu0 0.0
    %373 = vmatpush1.xpose.msra.mxu0 0.0
    %374 = vmatprep.subr.mxu0 0.0
    %375 = vmatpush1.xpose.msra.mxu0 0.0
    %376 = vmatprep.subr.mxu0 0.0
    %377 = vmatpush1.xpose.msra.mxu0 0.0
    %378 = vmatprep.subr.mxu0 0.0
    %379 = vmatpush1.xpose.msra.mxu0 0.0
    %380 = vmatprep.subr.mxu0 0.0
    %381 = vmatpush1.xpose.msra.mxu0 0.0
    %382 = vmatprep.subr.mxu0 0.0
    %383 = vmatpush1.xpose.msra.mxu0 0.0
    %384 = vmatprep.subr.mxu0 0.0
    %385 = vmatpush1.xpose.msra.mxu0 0.0
    %386 = vmatprep.subr.mxu0 0.0
    %387 = vmatpush1.xpose.msra.mxu0 0.0
    %388 = vmatprep.subr.mxu0 0.0
    %389 = vmatpush1.xpose.msra.mxu0 0.0
    %390 = vmatprep.subr.mxu0 0.0
    %391 = vmatpush1.xpose.msra.mxu0 0.0
    %392 = vmatprep.subr.mxu0 0.0
    %393 = vmatpush1.xpose.msra.mxu0 0.0
    %394 = vmatprep.subr.mxu0 0.0
    %395 = vmatpush1.xpose.msra.mxu0 0.0
    %396 = vmatprep.mubr.f32.mxu0 0.0
    %397 = vmatmul.mubr.f32.gmra.mrb[0].mxu0 %v328
    %v398 = vpop.f32.mrb[0].mxu0
    %v399 = vadd.f32 0.0, %v398
    %v400 = vpop.f32.mrb[0].mxu0
    %401 = vdwg.mxu0
    %402 = vrot.lane.b32.xlu0 %v164, 96
    %v403 = vpop.permute.xlu0 %402
    %v404 = vsel %vm175, %v164, 0
    %v406 = vsel %vm175, %v403, 0
    %408 = vmatprep.subr.mxu0 0.0
    %409 = vmatpush1.xpose.msra.mxu0 %v406
    %410 = vmatprep.subr.mxu0 0.0
    %411 = vmatpush1.xpose.msra.mxu0 0.0
    %412 = vmatprep.subr.mxu0 0.0
    %413 = vmatpush1.xpose.msra.mxu0 0.0
    %414 = vmatprep.subr.mxu0 0.0
    %415 = vmatpush1.xpose.msra.mxu0 0.0
    %416 = vmatprep.subr.mxu0 0.0
    %417 = vmatpush1.xpose.msra.mxu0 0.0
    %418 = vmatprep.subr.mxu0 0.0
    %419 = vmatpush1.xpose.msra.mxu0 0.0
    %420 = vmatprep.subr.mxu0 0.0
    %421 = vmatpush1.xpose.msra.mxu0 0.0
    %422 = vmatprep.subr.mxu0 0.0
    %423 = vmatpush1.xpose.msra.mxu0 0.0
    %424 = vmatprep.subr.mxu0 0.0
    %425 = vmatpush1.xpose.msra.mxu0 0.0
    %426 = vmatprep.subr.mxu0 0.0
    %427 = vmatpush1.xpose.msra.mxu0 0.0
    %428 = vmatprep.subr.mxu0 0.0
    %429 = vmatpush1.xpose.msra.mxu0 0.0
    %430 = vmatprep.subr.mxu0 0.0
    %431 = vmatpush1.xpose.msra.mxu0 0.0
    %432 = vmatprep.subr.mxu0 0.0
    %433 = vmatpush1.xpose.msra.mxu0 0.0
    %434 = vmatprep.subr.mxu0 0.0
    %435 = vmatpush1.xpose.msra.mxu0 0.0
    %436 = vmatprep.subr.mxu0 0.0
    %437 = vmatpush1.xpose.msra.mxu0 0.0
    %438 = vmatprep.subr.mxu0 0.0
    %439 = vmatpush1.xpose.msra.mxu0 0.0
    %440 = vmatprep.subr.mxu0 0.0
    %441 = vmatpush1.xpose.msra.mxu0 0.0
    %442 = vmatprep.subr.mxu0 0.0
    %443 = vmatpush1.xpose.msra.mxu0 0.0
    %444 = vmatprep.subr.mxu0 0.0
    %445 = vmatpush1.xpose.msra.mxu0 0.0
    %446 = vmatprep.subr.mxu0 0.0
    %447 = vmatpush1.xpose.msra.mxu0 0.0
    %448 = vmatprep.subr.mxu0 0.0
    %449 = vmatpush1.xpose.msra.mxu0 0.0
    %450 = vmatprep.subr.mxu0 0.0
    %451 = vmatpush1.xpose.msra.mxu0 0.0
    %452 = vmatprep.subr.mxu0 0.0
    %453 = vmatpush1.xpose.msra.mxu0 0.0
    %454 = vmatprep.subr.mxu0 0.0
    %455 = vmatpush1.xpose.msra.mxu0 0.0
    %456 = vmatprep.subr.mxu0 0.0
    %457 = vmatpush1.xpose.msra.mxu0 0.0
    %458 = vmatprep.subr.mxu0 0.0
    %459 = vmatpush1.xpose.msra.mxu0 0.0
    %460 = vmatprep.subr.mxu0 0.0
    %461 = vmatpush1.xpose.msra.mxu0 0.0
    %462 = vmatprep.subr.mxu0 0.0
    %463 = vmatpush1.xpose.msra.mxu0 0.0
    %464 = vmatprep.subr.mxu0 0.0
    %465 = vmatpush1.xpose.msra.mxu0 0.0
    %466 = vmatprep.subr.mxu0 0.0
    %467 = vmatpush1.xpose.msra.mxu0 0.0
    %468 = vmatprep.subr.mxu0 0.0
    %469 = vmatpush1.xpose.msra.mxu0 0.0
    %470 = vmatprep.subr.mxu0 0.0
    %471 = vmatpush1.xpose.msra.mxu0 0.0
    %472 = vmatprep.mubr.f32.mxu0 0.0
    %473 = vmatmul.mubr.f32.gmra.mrb[0].mxu0 %v404
    %v474 = vpop.f32.mrb[0].mxu0
    %v475 = vadd.f32 0.0, %v474
    %v476 = vpop.f32.mrb[0].mxu0
    %477 = vdwg.mxu0
    %478 = vrot.lane.b32.xlu0 %v166, 96
    %v479 = vpop.permute.xlu0 %478
    %v480 = vsel %vm175, %v166, 0
    %v482 = vsel %vm175, %v479, 0
    %484 = vmatprep.subr.mxu0 0.0
    %485 = vmatpush1.xpose.msra.mxu0 %v482
    %486 = vmatprep.subr.mxu0 0.0
    %487 = vmatpush1.xpose.msra.mxu0 0.0
    %488 = vmatprep.subr.mxu0 0.0
    %489 = vmatpush1.xpose.msra.mxu0 0.0
    %490 = vmatprep.subr.mxu0 0.0
    %491 = vmatpush1.xpose.msra.mxu0 0.0
    %492 = vmatprep.subr.mxu0 0.0
    %493 = vmatpush1.xpose.msra.mxu0 0.0
    %494 = vmatprep.subr.mxu0 0.0
    %495 = vmatpush1.xpose.msra.mxu0 0.0
    %496 = vmatprep.subr.mxu0 0.0
    %497 = vmatpush1.xpose.msra.mxu0 0.0
    %498 = vmatprep.subr.mxu0 0.0
    %499 = vmatpush1.xpose.msra.mxu0 0.0
    %500 = vmatprep.subr.mxu0 0.0
    %501 = vmatpush1.xpose.msra.mxu0 0.0
    %502 = vmatprep.subr.mxu0 0.0
    %503 = vmatpush1.xpose.msra.mxu0 0.0
    %504 = vmatprep.subr.mxu0 0.0
    %505 = vmatpush1.xpose.msra.mxu0 0.0
    %506 = vmatprep.subr.mxu0 0.0
    %507 = vmatpush1.xpose.msra.mxu0 0.0
    %508 = vmatprep.subr.mxu0 0.0
    %509 = vmatpush1.xpose.msra.mxu0 0.0
    %510 = vmatprep.subr.mxu0 0.0
    %511 = vmatpush1.xpose.msra.mxu0 0.0
    %512 = vmatprep.subr.mxu0 0.0
    %513 = vmatpush1.xpose.msra.mxu0 0.0
    %514 = vmatprep.subr.mxu0 0.0
    %515 = vmatpush1.xpose.msra.mxu0 0.0
    %516 = vmatprep.subr.mxu0 0.0
    %517 = vmatpush1.xpose.msra.mxu0 0.0
    %518 = vmatprep.subr.mxu0 0.0
    %519 = vmatpush1.xpose.msra.mxu0 0.0
    %520 = vmatprep.subr.mxu0 0.0
    %521 = vmatpush1.xpose.msra.mxu0 0.0
    %522 = vmatprep.subr.mxu0 0.0
    %523 = vmatpush1.xpose.msra.mxu0 0.0
    %524 = vmatprep.subr.mxu0 0.0
    %525 = vmatpush1.xpose.msra.mxu0 0.0
    %526 = vmatprep.subr.mxu0 0.0
    %527 = vmatpush1.xpose.msra.mxu0 0.0
    %528 = vmatprep.subr.mxu0 0.0
    %529 = vmatpush1.xpose.msra.mxu0 0.0
    %530 = vmatprep.subr.mxu0 0.0
    %531 = vmatpush1.xpose.msra.mxu0 0.0
    %532 = vmatprep.subr.mxu0 0.0
    %533 = vmatpush1.xpose.msra.mxu0 0.0
    %534 = vmatprep.subr.mxu0 0.0
    %535 = vmatpush1.xpose.msra.mxu0 0.0
    %536 = vmatprep.subr.mxu0 0.0
    %537 = vmatpush1.xpose.msra.mxu0 0.0
    %538 = vmatprep.subr.mxu0 0.0
    %539 = vmatpush1.xpose.msra.mxu0 0.0
    %540 = vmatprep.subr.mxu0 0.0
    %541 = vmatpush1.xpose.msra.mxu0 0.0
    %542 = vmatprep.subr.mxu0 0.0
    %543 = vmatpush1.xpose.msra.mxu0 0.0
    %544 = vmatprep.subr.mxu0 0.0
    %545 = vmatpush1.xpose.msra.mxu0 0.0
    %546 = vmatprep.subr.mxu0 0.0
    %547 = vmatpush1.xpose.msra.mxu0 0.0
    %548 = vmatprep.mubr.f32.mxu0 0.0
    %549 = vmatmul.mubr.f32.gmra.mrb[0].mxu0 %v480
    %v550 = vpop.f32.mrb[0].mxu0
    %v551 = vadd.f32 0.0, %v550
    %v552 = vpop.f32.mrb[0].mxu0
    %553 = vdwg.mxu0
    %554 = vrot.lane.b32.xlu0 %v168, 96
    %v555 = vpop.permute.xlu0 %554
    %v556 = vsel %vm175, %v168, 0
    %v558 = vsel %vm175, %v555, 0
    %560 = vmatprep.subr.mxu0 0.0
    %561 = vmatpush1.xpose.msra.mxu0 %v558
    %562 = vmatprep.subr.mxu0 0.0
    %563 = vmatpush1.xpose.msra.mxu0 0.0
    %564 = vmatprep.subr.mxu0 0.0
    %565 = vmatpush1.xpose.msra.mxu0 0.0
    %566 = vmatprep.subr.mxu0 0.0
    %567 = vmatpush1.xpose.msra.mxu0 0.0
    %568 = vmatprep.subr.mxu0 0.0
    %569 = vmatpush1.xpose.msra.mxu0 0.0
    %570 = vmatprep.subr.mxu0 0.0
    %571 = vmatpush1.xpose.msra.mxu0 0.0
    %572 = vmatprep.subr.mxu0 0.0
    %573 = vmatpush1.xpose.msra.mxu0 0.0
    %574 = vmatprep.subr.mxu0 0.0
    %575 = vmatpush1.xpose.msra.mxu0 0.0
    %576 = vmatprep.subr.mxu0 0.0
    %577 = vmatpush1.xpose.msra.mxu0 0.0
    %578 = vmatprep.subr.mxu0 0.0
    %579 = vmatpush1.xpose.msra.mxu0 0.0
    %580 = vmatprep.subr.mxu0 0.0
    %581 = vmatpush1.xpose.msra.mxu0 0.0
    %582 = vmatprep.subr.mxu0 0.0
    %583 = vmatpush1.xpose.msra.mxu0 0.0
    %584 = vmatprep.subr.mxu0 0.0
    %585 = vmatpush1.xpose.msra.mxu0 0.0
    %586 = vmatprep.subr.mxu0 0.0
    %587 = vmatpush1.xpose.msra.mxu0 0.0
    %588 = vmatprep.subr.mxu0 0.0
    %589 = vmatpush1.xpose.msra.mxu0 0.0
    %590 = vmatprep.subr.mxu0 0.0
    %591 = vmatpush1.xpose.msra.mxu0 0.0
    %592 = vmatprep.subr.mxu0 0.0
    %593 = vmatpush1.xpose.msra.mxu0 0.0
    %594 = vmatprep.subr.mxu0 0.0
    %595 = vmatpush1.xpose.msra.mxu0 0.0
    %596 = vmatprep.subr.mxu0 0.0
    %597 = vmatpush1.xpose.msra.mxu0 0.0
    %598 = vmatprep.subr.mxu0 0.0
    %599 = vmatpush1.xpose.msra.mxu0 0.0
    %600 = vmatprep.subr.mxu0 0.0
    %601 = vmatpush1.xpose.msra.mxu0 0.0
    %602 = vmatprep.subr.mxu0 0.0
    %603 = vmatpush1.xpose.msra.mxu0 0.0
    %604 = vmatprep.subr.mxu0 0.0
    %605 = vmatpush1.xpose.msra.mxu0 0.0
    %606 = vmatprep.subr.mxu0 0.0
    %607 = vmatpush1.xpose.msra.mxu0 0.0
    %608 = vmatprep.subr.mxu0 0.0
    %609 = vmatpush1.xpose.msra.mxu0 0.0
    %610 = vmatprep.subr.mxu0 0.0
    %611 = vmatpush1.xpose.msra.mxu0 0.0
    %612 = vmatprep.subr.mxu0 0.0
    %613 = vmatpush1.xpose.msra.mxu0 0.0
    %614 = vmatprep.subr.mxu0 0.0
    %615 = vmatpush1.xpose.msra.mxu0 0.0
    %616 = vmatprep.subr.mxu0 0.0
    %617 = vmatpush1.xpose.msra.mxu0 0.0
    %618 = vmatprep.subr.mxu0 0.0
    %619 = vmatpush1.xpose.msra.mxu0 0.0
    %620 = vmatprep.subr.mxu0 0.0
    %621 = vmatpush1.xpose.msra.mxu0 0.0
    %622 = vmatprep.subr.mxu0 0.0
    %623 = vmatpush1.xpose.msra.mxu0 0.0
    %624 = vmatprep.mubr.f32.mxu0 0.0
    %625 = vmatmul.mubr.f32.gmra.mrb[0].mxu0 %v556
    %v626 = vpop.f32.mrb[0].mxu0
    %v627 = vadd.f32 0.0, %v626
    %v628 = vpop.f32.mrb[0].mxu0
    %629 = vdwg.mxu0
    %630 = vrot.lane.b32.xlu0 %v170, 96
    %v631 = vpop.permute.xlu0 %630
    %v632 = vsel %vm175, %v170, 0
    %v634 = vsel %vm175, %v631, 0
    %636 = vmatprep.subr.mxu0 0.0
    %637 = vmatpush1.xpose.msra.mxu0 %v634
    %638 = vmatprep.subr.mxu0 0.0
    %639 = vmatpush1.xpose.msra.mxu0 0.0
    %640 = vmatprep.subr.mxu0 0.0
    %641 = vmatpush1.xpose.msra.mxu0 0.0
    %642 = vmatprep.subr.mxu0 0.0
    %643 = vmatpush1.xpose.msra.mxu0 0.0
    %644 = vmatprep.subr.mxu0 0.0
    %645 = vmatpush1.xpose.msra.mxu0 0.0
    %646 = vmatprep.subr.mxu0 0.0
    %647 = vmatpush1.xpose.msra.mxu0 0.0
    %648 = vmatprep.subr.mxu0 0.0
    %649 = vmatpush1.xpose.msra.mxu0 0.0
    %650 = vmatprep.subr.mxu0 0.0
    %651 = vmatpush1.xpose.msra.mxu0 0.0
    %652 = vmatprep.subr.mxu0 0.0
    %653 = vmatpush1.xpose.msra.mxu0 0.0
    %654 = vmatprep.subr.mxu0 0.0
    %655 = vmatpush1.xpose.msra.mxu0 0.0
    %656 = vmatprep.subr.mxu0 0.0
    %657 = vmatpush1.xpose.msra.mxu0 0.0
    %658 = vmatprep.subr.mxu0 0.0
    %659 = vmatpush1.xpose.msra.mxu0 0.0
    %660 = vmatprep.subr.mxu0 0.0
    %661 = vmatpush1.xpose.msra.mxu0 0.0
    %662 = vmatprep.subr.mxu0 0.0
    %663 = vmatpush1.xpose.msra.mxu0 0.0
    %664 = vmatprep.subr.mxu0 0.0
    %665 = vmatpush1.xpose.msra.mxu0 0.0
    %666 = vmatprep.subr.mxu0 0.0
    %667 = vmatpush1.xpose.msra.mxu0 0.0
    %668 = vmatprep.subr.mxu0 0.0
    %669 = vmatpush1.xpose.msra.mxu0 0.0
    %670 = vmatprep.subr.mxu0 0.0
    %671 = vmatpush1.xpose.msra.mxu0 0.0
    %672 = vmatprep.subr.mxu0 0.0
    %673 = vmatpush1.xpose.msra.mxu0 0.0
    %674 = vmatprep.subr.mxu0 0.0
    %675 = vmatpush1.xpose.msra.mxu0 0.0
    %676 = vmatprep.subr.mxu0 0.0
    %677 = vmatpush1.xpose.msra.mxu0 0.0
    %678 = vmatprep.subr.mxu0 0.0
    %679 = vmatpush1.xpose.msra.mxu0 0.0
    %680 = vmatprep.subr.mxu0 0.0
    %681 = vmatpush1.xpose.msra.mxu0 0.0
    %682 = vmatprep.subr.mxu0 0.0
    %683 = vmatpush1.xpose.msra.mxu0 0.0
    %684 = vmatprep.subr.mxu0 0.0
    %685 = vmatpush1.xpose.msra.mxu0 0.0
    %686 = vmatprep.subr.mxu0 0.0
    %687 = vmatpush1.xpose.msra.mxu0 0.0
    %688 = vmatprep.subr.mxu0 0.0
    %689 = vmatpush1.xpose.msra.mxu0 0.0
    %690 = vmatprep.subr.mxu0 0.0
    %691 = vmatpush1.xpose.msra.mxu0 0.0
    %692 = vmatprep.subr.mxu0 0.0
    %693 = vmatpush1.xpose.msra.mxu0 0.0
    %694 = vmatprep.subr.mxu0 0.0
    %695 = vmatpush1.xpose.msra.mxu0 0.0
    %696 = vmatprep.subr.mxu0 0.0
    %697 = vmatpush1.xpose.msra.mxu0 0.0
    %698 = vmatprep.subr.mxu0 0.0
    %699 = vmatpush1.xpose.msra.mxu0 0.0
    %700 = vmatprep.mubr.f32.mxu0 0.0
    %701 = vmatmul.mubr.f32.gmra.mrb[0].mxu0 %v632
    %v702 = vpop.f32.mrb[0].mxu0
    %v703 = vadd.f32 0.0, %v702
    %v704 = vpop.f32.mrb[0].mxu0
    %705 = vdwg.mxu0
    %706 = vrot.lane.b32.xlu0 %v172, 96
    %v707 = vpop.permute.xlu0 %706
    %v708 = vsel %vm175, %v172, 0
    %v710 = vsel %vm175, %v707, 0
    %712 = vmatprep.subr.mxu0 0.0
    %713 = vmatpush1.xpose.msra.mxu0 %v710
    %714 = vmatprep.subr.mxu0 0.0
    %715 = vmatpush1.xpose.msra.mxu0 0.0
    %716 = vmatprep.subr.mxu0 0.0
    %717 = vmatpush1.xpose.msra.mxu0 0.0
    %718 = vmatprep.subr.mxu0 0.0
    %719 = vmatpush1.xpose.msra.mxu0 0.0
    %720 = vmatprep.subr.mxu0 0.0
    %721 = vmatpush1.xpose.msra.mxu0 0.0
    %722 = vmatprep.subr.mxu0 0.0
    %723 = vmatpush1.xpose.msra.mxu0 0.0
    %724 = vmatprep.subr.mxu0 0.0
    %725 = vmatpush1.xpose.msra.mxu0 0.0
    %726 = vmatprep.subr.mxu0 0.0
    %727 = vmatpush1.xpose.msra.mxu0 0.0
    %728 = vmatprep.subr.mxu0 0.0
    %729 = vmatpush1.xpose.msra.mxu0 0.0
    %730 = vmatprep.subr.mxu0 0.0
    %731 = vmatpush1.xpose.msra.mxu0 0.0
    %732 = vmatprep.subr.mxu0 0.0
    %733 = vmatpush1.xpose.msra.mxu0 0.0
    %734 = vmatprep.subr.mxu0 0.0
    %735 = vmatpush1.xpose.msra.mxu0 0.0
    %736 = vmatprep.subr.mxu0 0.0
    %737 = vmatpush1.xpose.msra.mxu0 0.0
    %738 = vmatprep.subr.mxu0 0.0
    %739 = vmatpush1.xpose.msra.mxu0 0.0
    %740 = vmatprep.subr.mxu0 0.0
    %741 = vmatpush1.xpose.msra.mxu0 0.0
    %742 = vmatprep.subr.mxu0 0.0
    %743 = vmatpush1.xpose.msra.mxu0 0.0
    %744 = vmatprep.subr.mxu0 0.0
    %745 = vmatpush1.xpose.msra.mxu0 0.0
    %746 = vmatprep.subr.mxu0 0.0
    %747 = vmatpush1.xpose.msra.mxu0 0.0
    %748 = vmatprep.subr.mxu0 0.0
    %749 = vmatpush1.xpose.msra.mxu0 0.0
    %750 = vmatprep.subr.mxu0 0.0
    %751 = vmatpush1.xpose.msra.mxu0 0.0
    %752 = vmatprep.subr.mxu0 0.0
    %753 = vmatpush1.xpose.msra.mxu0 0.0
    %754 = vmatprep.subr.mxu0 0.0
    %755 = vmatpush1.xpose.msra.mxu0 0.0
    %756 = vmatprep.subr.mxu0 0.0
    %757 = vmatpush1.xpose.msra.mxu0 0.0
    %758 = vmatprep.subr.mxu0 0.0
    %759 = vmatpush1.xpose.msra.mxu0 0.0
    %760 = vmatprep.subr.mxu0 0.0
    %761 = vmatpush1.xpose.msra.mxu0 0.0
    %762 = vmatprep.subr.mxu0 0.0
    %763 = vmatpush1.xpose.msra.mxu0 0.0
    %764 = vmatprep.subr.mxu0 0.0
    %765 = vmatpush1.xpose.msra.mxu0 0.0
    %766 = vmatprep.subr.mxu0 0.0
    %767 = vmatpush1.xpose.msra.mxu0 0.0
    %768 = vmatprep.subr.mxu0 0.0
    %769 = vmatpush1.xpose.msra.mxu0 0.0
    %770 = vmatprep.subr.mxu0 0.0
    %771 = vmatpush1.xpose.msra.mxu0 0.0
    %772 = vmatprep.subr.mxu0 0.0
    %773 = vmatpush1.xpose.msra.mxu0 0.0
    %774 = vmatprep.subr.mxu0 0.0
    %775 = vmatpush1.xpose.msra.mxu0 0.0
    %776 = vmatprep.mubr.f32.mxu0 0.0
    %777 = vmatmul.mubr.f32.gmra.mrb[0].mxu0 %v708
    %v778 = vpop.f32.mrb[0].mxu0
    %v779 = vadd.f32 0.0, %v778
    %v780 = vpop.f32.mrb[0].mxu0
    %781 = vdwg.mxu0
    %v782 = vsel %vm175, %v247, -inf
    %783 = vmax.xlane.f32.xlu0 %v782
    %v784 = vpop.xlane.xlu0 %783
    %v785 = vsel %vm175, %v323, -inf
    %786 = vmax.xlane.f32.xlu0 %v785
    %v787 = vpop.xlane.xlu0 %786
    %v788 = vsel %vm175, %v399, -inf
    %789 = vmax.xlane.f32.xlu0 %v788
    %v790 = vpop.xlane.xlu0 %789
    %v791 = vsel %vm175, %v475, -inf
    %792 = vmax.xlane.f32.xlu0 %v791
    %v793 = vpop.xlane.xlu0 %792
    %v794 = vsel %vm175, %v551, -inf
    %795 = vmax.xlane.f32.xlu0 %v794
    %v796 = vpop.xlane.xlu0 %795
    %v797 = vsel %vm175, %v627, -inf
    %798 = vmax.xlane.f32.xlu0 %v797
    %v799 = vpop.xlane.xlu0 %798
    %v800 = vsel %vm175, %v703, -inf
    %801 = vmax.xlane.f32.xlu0 %v800
    %v802 = vpop.xlane.xlu0 %801
    %v803 = vsel %vm175, %v779, -inf
    %804 = vmax.xlane.f32.xlu0 %v803
    %v805 = vpop.xlane.xlu0 %804
    %v806 = vsub.f32 %v247, %v784
    %v807 = vsub.f32 %v323, %v787
    %v808 = vsub.f32 %v399, %v790
    %v809 = vsub.f32 %v475, %v793
    %v810 = vsub.f32 %v551, %v796
    %v811 = vsub.f32 %v627, %v799
    %v812 = vsub.f32 %v703, %v802
    %v813 = vsub.f32 %v779, %v805
    %v814 = vmul.f32 %v806, 1.442695
    %v815 = vpow.pop %v814
    %v816 = vmul.f32 %v807, 1.442695
    %v817 = vpow.pop %v816
    %v818 = vmul.f32 %v808, 1.442695
    %v819 = vpow.pop %v818
    %v820 = vmul.f32 %v809, 1.442695
    %v821 = vpow.pop %v820
    %v822 = vmul.f32 %v810, 1.442695
    %v823 = vpow.pop %v822
    %v824 = vmul.f32 %v811, 1.442695
    %v825 = vpow.pop %v824
    %v826 = vmul.f32 %v812, 1.442695
    %v827 = vpow.pop %v826
    %v828 = vmul.f32 %v813, 1.442695
    %v829 = vpow.pop %v828
    %v830 = vsel %vm175, %v815, 0.0
    %831 = vadd.xlane.f32.xlu0 %v830
    %v832 = vpop.xlane.xlu0 %831
    %v833 = vsel %vm175, %v817, 0.0
    %834 = vadd.xlane.f32.xlu0 %v833
    %v835 = vpop.xlane.xlu0 %834
    %v836 = vsel %vm175, %v819, 0.0
    %837 = vadd.xlane.f32.xlu0 %v836
    %v838 = vpop.xlane.xlu0 %837
    %v839 = vsel %vm175, %v821, 0.0
    %840 = vadd.xlane.f32.xlu0 %v839
    %v841 = vpop.xlane.xlu0 %840
    %v842 = vsel %vm175, %v823, 0.0
    %843 = vadd.xlane.f32.xlu0 %v842
    %v844 = vpop.xlane.xlu0 %843
    %v845 = vsel %vm175, %v825, 0.0
    %846 = vadd.xlane.f32.xlu0 %v845
    %v847 = vpop.xlane.xlu0 %846
    %v848 = vsel %vm175, %v827, 0.0
    %849 = vadd.xlane.f32.xlu0 %v848
    %v850 = vpop.xlane.xlu0 %849
    %v851 = vsel %vm175, %v829, 0.0
    %852 = vadd.xlane.f32.xlu0 %v851
    %v853 = vpop.xlane.xlu0 %852
    %v854 = vrcp.pop %v832
    %v855 = vrcp.pop %v835
    %v856 = vrcp.pop %v838
    %v857 = vrcp.pop %v841
    %v858 = vrcp.pop %v844
    %v859 = vrcp.pop %v847
    %v860 = vrcp.pop %v850
    %v861 = vrcp.pop %v853
    %v862 = vmul.f32 %v815, %v854
    %v863 = vmul.f32 %v817, %v855
    %v864 = vmul.f32 %v819, %v856
    %v865 = vmul.f32 %v821, %v857
    %v866 = vmul.f32 %v823, %v858
    %v867 = vmul.f32 %v825, %v859
    %v868 = vmul.f32 %v827, %v860
    %v869 = vmul.f32 %v829, %v861
    %870 = vrot.lane.b32.xlu0 %v151, 64
    %v871 = vpop.permute.xlu0 %870
    %v874 = vsel %vm175, %v862, 0
    %876 = vmatprep.subr.mxu0 0.0
    %877 = vmatpush1.msra.mxu0 %v871
    %878 = vmatprep.subr.mxu0 0.0
    %879 = vmatpush1.msra.mxu0 0.0
    %880 = vmatprep.subr.mxu0 0.0
    %881 = vmatpush1.msra.mxu0 0.0
    %882 = vmatprep.subr.mxu0 0.0
    %883 = vmatpush1.msra.mxu0 0.0
    %884 = vmatprep.subr.mxu0 0.0
    %885 = vmatpush1.msra.mxu0 0.0
    %886 = vmatprep.subr.mxu0 0.0
    %887 = vmatpush1.msra.mxu0 0.0
    %888 = vmatprep.subr.mxu0 0.0
    %889 = vmatpush1.msra.mxu0 0.0
    %890 = vmatprep.subr.mxu0 0.0
    %891 = vmatpush1.msra.mxu0 0.0
    %892 = vmatprep.subr.mxu0 0.0
    %893 = vmatpush1.msra.mxu0 0.0
    %894 = vmatprep.subr.mxu0 0.0
    %895 = vmatpush1.msra.mxu0 0.0
    %896 = vmatprep.subr.mxu0 0.0
    %897 = vmatpush1.msra.mxu0 0.0
    %898 = vmatprep.subr.mxu0 0.0
    %899 = vmatpush1.msra.mxu0 0.0
    %900 = vmatprep.subr.mxu0 0.0
    %901 = vmatpush1.msra.mxu0 0.0
    %902 = vmatprep.subr.mxu0 0.0
    %903 = vmatpush1.msra.mxu0 0.0
    %904 = vmatprep.subr.mxu0 0.0
    %905 = vmatpush1.msra.mxu0 0.0
    %906 = vmatprep.subr.mxu0 0.0
    %907 = vmatpush1.msra.mxu0 0.0
    %908 = vmatprep.subr.mxu0 0.0
    %909 = vmatpush1.msra.mxu0 0.0
    %910 = vmatprep.subr.mxu0 0.0
    %911 = vmatpush1.msra.mxu0 0.0
    %912 = vmatprep.subr.mxu0 0.0
    %913 = vmatpush1.msra.mxu0 0.0
    %914 = vmatprep.subr.mxu0 0.0
    %915 = vmatpush1.msra.mxu0 0.0
    %916 = vmatprep.subr.mxu0 0.0
    %917 = vmatpush1.msra.mxu0 0.0
    %918 = vmatprep.subr.mxu0 0.0
    %919 = vmatpush1.msra.mxu0 0.0
    %920 = vmatprep.subr.mxu0 0.0
    %921 = vmatpush1.msra.mxu0 0.0
    %922 = vmatprep.subr.mxu0 0.0
    %923 = vmatpush1.msra.mxu0 0.0
    %924 = vmatprep.subr.mxu0 0.0
    %925 = vmatpush1.msra.mxu0 0.0
    %926 = vmatprep.subr.mxu0 0.0
    %927 = vmatpush1.msra.mxu0 0.0
    %928 = vmatprep.subr.mxu0 0.0
    %929 = vmatpush1.msra.mxu0 0.0
    %930 = vmatprep.subr.mxu0 0.0
    %931 = vmatpush1.msra.mxu0 0.0
    %932 = vmatprep.subr.mxu0 0.0
    %933 = vmatpush1.msra.mxu0 0.0
    %934 = vmatprep.subr.mxu0 0.0
    %935 = vmatpush1.msra.mxu0 0.0
    %936 = vmatprep.subr.mxu0 0.0
    %937 = vmatpush1.msra.mxu0 0.0
    %938 = vmatprep.subr.mxu0 0.0
    %939 = vmatpush1.msra.mxu0 0.0
    %940 = vmatprep.mubr.f32.mxu0 0.0
    %941 = vmatmul.mubr.f32.gmra.mrb[0].mxu0 %v874
    %v942 = vpop.f32.mrb[0].mxu0
    %v943 = vadd.f32 0.0, %v942
    %v944 = vpop.f32.mrb[0].mxu0
    %945 = vdwg.mxu0
    %946 = vrot.lane.b32.xlu0 %v156, 64
    %v947 = vpop.permute.xlu0 %946
    %v950 = vsel %vm175, %v863, 0
    %952 = vmatprep.subr.mxu0 0.0
    %953 = vmatpush1.msra.mxu0 %v947
    %954 = vmatprep.subr.mxu0 0.0
    %955 = vmatpush1.msra.mxu0 0.0
    %956 = vmatprep.subr.mxu0 0.0
    %957 = vmatpush1.msra.mxu0 0.0
    %958 = vmatprep.subr.mxu0 0.0
    %959 = vmatpush1.msra.mxu0 0.0
    %960 = vmatprep.subr.mxu0 0.0
    %961 = vmatpush1.msra.mxu0 0.0
    %962 = vmatprep.subr.mxu0 0.0
    %963 = vmatpush1.msra.mxu0 0.0
    %964 = vmatprep.subr.mxu0 0.0
    %965 = vmatpush1.msra.mxu0 0.0
    %966 = vmatprep.subr.mxu0 0.0
    %967 = vmatpush1.msra.mxu0 0.0
    %968 = vmatprep.subr.mxu0 0.0
    %969 = vmatpush1.msra.mxu0 0.0
    %970 = vmatprep.subr.mxu0 0.0
    %971 = vmatpush1.msra.mxu0 0.0
    %972 = vmatprep.subr.mxu0 0.0
    %973 = vmatpush1.msra.mxu0 0.0
    %974 = vmatprep.subr.mxu0 0.0
    %975 = vmatpush1.msra.mxu0 0.0
    %976 = vmatprep.subr.mxu0 0.0
    %977 = vmatpush1.msra.mxu0 0.0
    %978 = vmatprep.subr.mxu0 0.0
    %979 = vmatpush1.msra.mxu0 0.0
    %980 = vmatprep.subr.mxu0 0.0
    %981 = vmatpush1.msra.mxu0 0.0
    %982 = vmatprep.subr.mxu0 0.0
    %983 = vmatpush1.msra.mxu0 0.0
    %984 = vmatprep.subr.mxu0 0.0
    %985 = vmatpush1.msra.mxu0 0.0
    %986 = vmatprep.subr.mxu0 0.0
    %987 = vmatpush1.msra.mxu0 0.0
    %988 = vmatprep.subr.mxu0 0.0
    %989 = vmatpush1.msra.mxu0 0.0
    %990 = vmatprep.subr.mxu0 0.0
    %991 = vmatpush1.msra.mxu0 0.0
    %992 = vmatprep.subr.mxu0 0.0
    %993 = vmatpush1.msra.mxu0 0.0
    %994 = vmatprep.subr.mxu0 0.0
    %995 = vmatpush1.msra.mxu0 0.0
    %996 = vmatprep.subr.mxu0 0.0
    %997 = vmatpush1.msra.mxu0 0.0
    %998 = vmatprep.subr.mxu0 0.0
    %999 = vmatpush1.msra.mxu0 0.0
    %1000 = vmatprep.subr.mxu0 0.0
    %1001 = vmatpush1.msra.mxu0 0.0
    %1002 = vmatprep.subr.mxu0 0.0
    %1003 = vmatpush1.msra.mxu0 0.0
    %1004 = vmatprep.subr.mxu0 0.0
    %1005 = vmatpush1.msra.mxu0 0.0
    %1006 = vmatprep.subr.mxu0 0.0
    %1007 = vmatpush1.msra.mxu0 0.0
    %1008 = vmatprep.subr.mxu0 0.0
    %1009 = vmatpush1.msra.mxu0 0.0
    %1010 = vmatprep.subr.mxu0 0.0
    %1011 = vmatpush1.msra.mxu0 0.0
    %1012 = vmatprep.subr.mxu0 0.0
    %1013 = vmatpush1.msra.mxu0 0.0
    %1014 = vmatprep.subr.mxu0 0.0
    %1015 = vmatpush1.msra.mxu0 0.0
    %1016 = vmatprep.mubr.f32.mxu0 0.0
    %1017 = vmatmul.mubr.f32.gmra.mrb[0].mxu0 %v950
    %v1018 = vpop.f32.mrb[0].mxu0
    %v1019 = vadd.f32 0.0, %v1018
    %v1020 = vpop.f32.mrb[0].mxu0
    %1021 = vdwg.mxu0
    %1022 = vrot.lane.b32.xlu0 %v161, 64
    %v1023 = vpop.permute.xlu0 %1022
    %v1026 = vsel %vm175, %v864, 0
    %1028 = vmatprep.subr.mxu0 0.0
    %1029 = vmatpush1.msra.mxu0 %v1023
    %1030 = vmatprep.subr.mxu0 0.0
    %1031 = vmatpush1.msra.mxu0 0.0
    %1032 = vmatprep.subr.mxu0 0.0
    %1033 = vmatpush1.msra.mxu0 0.0
    %1034 = vmatprep.subr.mxu0 0.0
    %1035 = vmatpush1.msra.mxu0 0.0
    %1036 = vmatprep.subr.mxu0 0.0
    %1037 = vmatpush1.msra.mxu0 0.0
    %1038 = vmatprep.subr.mxu0 0.0
    %1039 = vmatpush1.msra.mxu0 0.0
    %1040 = vmatprep.subr.mxu0 0.0
    %1041 = vmatpush1.msra.mxu0 0.0
    %1042 = vmatprep.subr.mxu0 0.0
    %1043 = vmatpush1.msra.mxu0 0.0
    %1044 = vmatprep.subr.mxu0 0.0
    %1045 = vmatpush1.msra.mxu0 0.0
    %1046 = vmatprep.subr.mxu0 0.0
    %1047 = vmatpush1.msra.mxu0 0.0
    %1048 = vmatprep.subr.mxu0 0.0
    %1049 = vmatpush1.msra.mxu0 0.0
    %1050 = vmatprep.subr.mxu0 0.0
    %1051 = vmatpush1.msra.mxu0 0.0
    %1052 = vmatprep.subr.mxu0 0.0
    %1053 = vmatpush1.msra.mxu0 0.0
    %1054 = vmatprep.subr.mxu0 0.0
    %1055 = vmatpush1.msra.mxu0 0.0
    %1056 = vmatprep.subr.mxu0 0.0
    %1057 = vmatpush1.msra.mxu0 0.0
    %1058 = vmatprep.subr.mxu0 0.0
    %1059 = vmatpush1.msra.mxu0 0.0
    %1060 = vmatprep.subr.mxu0 0.0
    %1061 = vmatpush1.msra.mxu0 0.0
    %1062 = vmatprep.subr.mxu0 0.0
    %1063 = vmatpush1.msra.mxu0 0.0
    %1064 = vmatprep.subr.mxu0 0.0
    %1065 = vmatpush1.msra.mxu0 0.0
    %1066 = vmatprep.subr.mxu0 0.0
    %1067 = vmatpush1.msra.mxu0 0.0
    %1068 = vmatprep.subr.mxu0 0.0
    %1069 = vmatpush1.msra.mxu0 0.0
    %1070 = vmatprep.subr.mxu0 0.0
    %1071 = vmatpush1.msra.mxu0 0.0
    %1072 = vmatprep.subr.mxu0 0.0
    %1073 = vmatpush1.msra.mxu0 0.0
    %1074 = vmatprep.subr.mxu0 0.0
    %1075 = vmatpush1.msra.mxu0 0.0
    %1076 = vmatprep.subr.mxu0 0.0
    %1077 = vmatpush1.msra.mxu0 0.0
    %1078 = vmatprep.subr.mxu0 0.0
    %1079 = vmatpush1.msra.mxu0 0.0
    %1080 = vmatprep.subr.mxu0 0.0
    %1081 = vmatpush1.msra.mxu0 0.0
    %1082 = vmatprep.subr.mxu0 0.0
    %1083 = vmatpush1.msra.mxu0 0.0
    %1084 = vmatprep.subr.mxu0 0.0
    %1085 = vmatpush1.msra.mxu0 0.0
    %1086 = vmatprep.subr.mxu0 0.0
    %1087 = vmatpush1.msra.mxu0 0.0
    %1088 = vmatprep.subr.mxu0 0.0
    %1089 = vmatpush1.msra.mxu0 0.0
    %1090 = vmatprep.subr.mxu0 0.0
    %1091 = vmatpush1.msra.mxu0 0.0
    %1092 = vmatprep.mubr.f32.mxu0 0.0
    %1093 = vmatmul.mubr.f32.gmra.mrb[0].mxu0 %v1026
    %v1094 = vpop.f32.mrb[0].mxu0
    %v1095 = vadd.f32 0.0, %v1094
    %v1096 = vpop.f32.mrb[0].mxu0
    %1097 = vdwg.mxu0
    %1098 = vrot.lane.b32.xlu0 %v164, 64
    %v1099 = vpop.permute.xlu0 %1098
    %v1102 = vsel %vm175, %v865, 0
    %1104 = vmatprep.subr.mxu0 0.0
    %1105 = vmatpush1.msra.mxu0 %v1099
    %1106 = vmatprep.subr.mxu0 0.0
    %1107 = vmatpush1.msra.mxu0 0.0
    %1108 = vmatprep.subr.mxu0 0.0
    %1109 = vmatpush1.msra.mxu0 0.0
    %1110 = vmatprep.subr.mxu0 0.0
    %1111 = vmatpush1.msra.mxu0 0.0
    %1112 = vmatprep.subr.mxu0 0.0
    %1113 = vmatpush1.msra.mxu0 0.0
    %1114 = vmatprep.subr.mxu0 0.0
    %1115 = vmatpush1.msra.mxu0 0.0
    %1116 = vmatprep.subr.mxu0 0.0
    %1117 = vmatpush1.msra.mxu0 0.0
    %1118 = vmatprep.subr.mxu0 0.0
    %1119 = vmatpush1.msra.mxu0 0.0
    %1120 = vmatprep.subr.mxu0 0.0
    %1121 = vmatpush1.msra.mxu0 0.0
    %1122 = vmatprep.subr.mxu0 0.0
    %1123 = vmatpush1.msra.mxu0 0.0
    %1124 = vmatprep.subr.mxu0 0.0
    %1125 = vmatpush1.msra.mxu0 0.0
    %1126 = vmatprep.subr.mxu0 0.0
    %1127 = vmatpush1.msra.mxu0 0.0
    %1128 = vmatprep.subr.mxu0 0.0
    %1129 = vmatpush1.msra.mxu0 0.0
    %1130 = vmatprep.subr.mxu0 0.0
    %1131 = vmatpush1.msra.mxu0 0.0
    %1132 = vmatprep.subr.mxu0 0.0
    %1133 = vmatpush1.msra.mxu0 0.0
    %1134 = vmatprep.subr.mxu0 0.0
    %1135 = vmatpush1.msra.mxu0 0.0
    %1136 = vmatprep.subr.mxu0 0.0
    %1137 = vmatpush1.msra.mxu0 0.0
    %1138 = vmatprep.subr.mxu0 0.0
    %1139 = vmatpush1.msra.mxu0 0.0
    %1140 = vmatprep.subr.mxu0 0.0
    %1141 = vmatpush1.msra.mxu0 0.0
    %1142 = vmatprep.subr.mxu0 0.0
    %1143 = vmatpush1.msra.mxu0 0.0
    %1144 = vmatprep.subr.mxu0 0.0
    %1145 = vmatpush1.msra.mxu0 0.0
    %1146 = vmatprep.subr.mxu0 0.0
    %1147 = vmatpush1.msra.mxu0 0.0
    %1148 = vmatprep.subr.mxu0 0.0
    %1149 = vmatpush1.msra.mxu0 0.0
    %1150 = vmatprep.subr.mxu0 0.0
    %1151 = vmatpush1.msra.mxu0 0.0
    %1152 = vmatprep.subr.mxu0 0.0
    %1153 = vmatpush1.msra.mxu0 0.0
    %1154 = vmatprep.subr.mxu0 0.0
    %1155 = vmatpush1.msra.mxu0 0.0
    %1156 = vmatprep.subr.mxu0 0.0
    %1157 = vmatpush1.msra.mxu0 0.0
    %1158 = vmatprep.subr.mxu0 0.0
    %1159 = vmatpush1.msra.mxu0 0.0
    %1160 = vmatprep.subr.mxu0 0.0
    %1161 = vmatpush1.msra.mxu0 0.0
    %1162 = vmatprep.subr.mxu0 0.0
    %1163 = vmatpush1.msra.mxu0 0.0
    %1164 = vmatprep.subr.mxu0 0.0
    %1165 = vmatpush1.msra.mxu0 0.0
    %1166 = vmatprep.subr.mxu0 0.0
    %1167 = vmatpush1.msra.mxu0 0.0
    %1168 = vmatprep.mubr.f32.mxu0 0.0
    %1169 = vmatmul.mubr.f32.gmra.mrb[0].mxu0 %v1102
    %v1170 = vpop.f32.mrb[0].mxu0
    %v1171 = vadd.f32 0.0, %v1170
    %v1172 = vpop.f32.mrb[0].mxu0
    %1173 = vdwg.mxu0
    %1174 = vrot.lane.b32.xlu0 %v166, 64
    %v1175 = vpop.permute.xlu0 %1174
    %v1178 = vsel %vm175, %v866, 0
    %1180 = vmatprep.subr.mxu0 0.0
    %1181 = vmatpush1.msra.mxu0 %v1175
    %1182 = vmatprep.subr.mxu0 0.0
    %1183 = vmatpush1.msra.mxu0 0.0
    %1184 = vmatprep.subr.mxu0 0.0
    %1185 = vmatpush1.msra.mxu0 0.0
    %1186 = vmatprep.subr.mxu0 0.0
    %1187 = vmatpush1.msra.mxu0 0.0
    %1188 = vmatprep.subr.mxu0 0.0
    %1189 = vmatpush1.msra.mxu0 0.0
    %1190 = vmatprep.subr.mxu0 0.0
    %1191 = vmatpush1.msra.mxu0 0.0
    %1192 = vmatprep.subr.mxu0 0.0
    %1193 = vmatpush1.msra.mxu0 0.0
    %1194 = vmatprep.subr.mxu0 0.0
    %1195 = vmatpush1.msra.mxu0 0.0
    %1196 = vmatprep.subr.mxu0 0.0
    %1197 = vmatpush1.msra.mxu0 0.0
    %1198 = vmatprep.subr.mxu0 0.0
    %1199 = vmatpush1.msra.mxu0 0.0
    %1200 = vmatprep.subr.mxu0 0.0
    %1201 = vmatpush1.msra.mxu0 0.0
    %1202 = vmatprep.subr.mxu0 0.0
    %1203 = vmatpush1.msra.mxu0 0.0
    %1204 = vmatprep.subr.mxu0 0.0
    %1205 = vmatpush1.msra.mxu0 0.0
    %1206 = vmatprep.subr.mxu0 0.0
    %1207 = vmatpush1.msra.mxu0 0.0
    %1208 = vmatprep.subr.mxu0 0.0
    %1209 = vmatpush1.msra.mxu0 0.0
    %1210 = vmatprep.subr.mxu0 0.0
    %1211 = vmatpush1.msra.mxu0 0.0
    %1212 = vmatprep.subr.mxu0 0.0
    %1213 = vmatpush1.msra.mxu0 0.0
    %1214 = vmatprep.subr.mxu0 0.0
    %1215 = vmatpush1.msra.mxu0 0.0
    %1216 = vmatprep.subr.mxu0 0.0
    %1217 = vmatpush1.msra.mxu0 0.0
    %1218 = vmatprep.subr.mxu0 0.0
    %1219 = vmatpush1.msra.mxu0 0.0
    %1220 = vmatprep.subr.mxu0 0.0
    %1221 = vmatpush1.msra.mxu0 0.0
    %1222 = vmatprep.subr.mxu0 0.0
    %1223 = vmatpush1.msra.mxu0 0.0
    %1224 = vmatprep.subr.mxu0 0.0
    %1225 = vmatpush1.msra.mxu0 0.0
    %1226 = vmatprep.subr.mxu0 0.0
    %1227 = vmatpush1.msra.mxu0 0.0
    %1228 = vmatprep.subr.mxu0 0.0
    %1229 = vmatpush1.msra.mxu0 0.0
    %1230 = vmatprep.subr.mxu0 0.0
    %1231 = vmatpush1.msra.mxu0 0.0
    %1232 = vmatprep.subr.mxu0 0.0
    %1233 = vmatpush1.msra.mxu0 0.0
    %1234 = vmatprep.subr.mxu0 0.0
    %1235 = vmatpush1.msra.mxu0 0.0
    %1236 = vmatprep.subr.mxu0 0.0
    %1237 = vmatpush1.msra.mxu0 0.0
    %1238 = vmatprep.subr.mxu0 0.0
    %1239 = vmatpush1.msra.mxu0 0.0
    %1240 = vmatprep.subr.mxu0 0.0
    %1241 = vmatpush1.msra.mxu0 0.0
    %1242 = vmatprep.subr.mxu0 0.0
    %1243 = vmatpush1.msra.mxu0 0.0
    %1244 = vmatprep.mubr.f32.mxu0 0.0
    %1245 = vmatmul.mubr.f32.gmra.mrb[0].mxu0 %v1178
    %v1246 = vpop.f32.mrb[0].mxu0
    %v1247 = vadd.f32 0.0, %v1246
    %v1248 = vpop.f32.mrb[0].mxu0
    %1249 = vdwg.mxu0
    %1250 = vrot.lane.b32.xlu0 %v168, 64
    %v1251 = vpop.permute.xlu0 %1250
    %v1254 = vsel %vm175, %v867, 0
    %1256 = vmatprep.subr.mxu0 0.0
    %1257 = vmatpush1.msra.mxu0 %v1251
    %1258 = vmatprep.subr.mxu0 0.0
    %1259 = vmatpush1.msra.mxu0 0.0
    %1260 = vmatprep.subr.mxu0 0.0
    %1261 = vmatpush1.msra.mxu0 0.0
    %1262 = vmatprep.subr.mxu0 0.0
    %1263 = vmatpush1.msra.mxu0 0.0
    %1264 = vmatprep.subr.mxu0 0.0
    %1265 = vmatpush1.msra.mxu0 0.0
    %1266 = vmatprep.subr.mxu0 0.0
    %1267 = vmatpush1.msra.mxu0 0.0
    %1268 = vmatprep.subr.mxu0 0.0
    %1269 = vmatpush1.msra.mxu0 0.0
    %1270 = vmatprep.subr.mxu0 0.0
    %1271 = vmatpush1.msra.mxu0 0.0
    %1272 = vmatprep.subr.mxu0 0.0
    %1273 = vmatpush1.msra.mxu0 0.0
    %1274 = vmatprep.subr.mxu0 0.0
    %1275 = vmatpush1.msra.mxu0 0.0
    %1276 = vmatprep.subr.mxu0 0.0
    %1277 = vmatpush1.msra.mxu0 0.0
    %1278 = vmatprep.subr.mxu0 0.0
    %1279 = vmatpush1.msra.mxu0 0.0
    %1280 = vmatprep.subr.mxu0 0.0
    %1281 = vmatpush1.msra.mxu0 0.0
    %1282 = vmatprep.subr.mxu0 0.0
    %1283 = vmatpush1.msra.mxu0 0.0
    %1284 = vmatprep.subr.mxu0 0.0
    %1285 = vmatpush1.msra.mxu0 0.0
    %1286 = vmatprep.subr.mxu0 0.0
    %1287 = vmatpush1.msra.mxu0 0.0
    %1288 = vmatprep.subr.mxu0 0.0
    %1289 = vmatpush1.msra.mxu0 0.0
    %1290 = vmatprep.subr.mxu0 0.0
    %1291 = vmatpush1.msra.mxu0 0.0
    %1292 = vmatprep.subr.mxu0 0.0
    %1293 = vmatpush1.msra.mxu0 0.0
    %1294 = vmatprep.subr.mxu0 0.0
    %1295 = vmatpush1.msra.mxu0 0.0
    %1296 = vmatprep.subr.mxu0 0.0
    %1297 = vmatpush1.msra.mxu0 0.0
    %1298 = vmatprep.subr.mxu0 0.0
    %1299 = vmatpush1.msra.mxu0 0.0
    %1300 = vmatprep.subr.mxu0 0.0
    %1301 = vmatpush1.msra.mxu0 0.0
    %1302 = vmatprep.subr.mxu0 0.0
    %1303 = vmatpush1.msra.mxu0 0.0
    %1304 = vmatprep.subr.mxu0 0.0
    %1305 = vmatpush1.msra.mxu0 0.0
    %1306 = vmatprep.subr.mxu0 0.0
    %1307 = vmatpush1.msra.mxu0 0.0
    %1308 = vmatprep.subr.mxu0 0.0
    %1309 = vmatpush1.msra.mxu0 0.0
    %1310 = vmatprep.subr.mxu0 0.0
    %1311 = vmatpush1.msra.mxu0 0.0
    %1312 = vmatprep.subr.mxu0 0.0
    %1313 = vmatpush1.msra.mxu0 0.0
    %1314 = vmatprep.subr.mxu0 0.0
    %1315 = vmatpush1.msra.mxu0 0.0
    %1316 = vmatprep.subr.mxu0 0.0
    %1317 = vmatpush1.msra.mxu0 0.0
    %1318 = vmatprep.subr.mxu0 0.0
    %1319 = vmatpush1.msra.mxu0 0.0
    %1320 = vmatprep.mubr.f32.mxu0 0.0
    %1321 = vmatmul.mubr.f32.gmra.mrb[0].mxu0 %v1254
    %v1322 = vpop.f32.mrb[0].mxu0
    %v1323 = vadd.f32 0.0, %v1322
    %v1324 = vpop.f32.mrb[0].mxu0
    %1325 = vdwg.mxu0
    %1326 = vrot.lane.b32.xlu0 %v170, 64
    %v1327 = vpop.permute.xlu0 %1326
    %v1330 = vsel %vm175, %v868, 0
    %1332 = vmatprep.subr.mxu0 0.0
    %1333 = vmatpush1.msra.mxu0 %v1327
    %1334 = vmatprep.subr.mxu0 0.0
    %1335 = vmatpush1.msra.mxu0 0.0
    %1336 = vmatprep.subr.mxu0 0.0
    %1337 = vmatpush1.msra.mxu0 0.0
    %1338 = vmatprep.subr.mxu0 0.0
    %1339 = vmatpush1.msra.mxu0 0.0
    %1340 = vmatprep.subr.mxu0 0.0
    %1341 = vmatpush1.msra.mxu0 0.0
    %1342 = vmatprep.subr.mxu0 0.0
    %1343 = vmatpush1.msra.mxu0 0.0
    %1344 = vmatprep.subr.mxu0 0.0
    %1345 = vmatpush1.msra.mxu0 0.0
    %1346 = vmatprep.subr.mxu0 0.0
    %1347 = vmatpush1.msra.mxu0 0.0
    %1348 = vmatprep.subr.mxu0 0.0
    %1349 = vmatpush1.msra.mxu0 0.0
    %1350 = vmatprep.subr.mxu0 0.0
    %1351 = vmatpush1.msra.mxu0 0.0
    %1352 = vmatprep.subr.mxu0 0.0
    %1353 = vmatpush1.msra.mxu0 0.0
    %1354 = vmatprep.subr.mxu0 0.0
    %1355 = vmatpush1.msra.mxu0 0.0
    %1356 = vmatprep.subr.mxu0 0.0
    %1357 = vmatpush1.msra.mxu0 0.0
    %1358 = vmatprep.subr.mxu0 0.0
    %1359 = vmatpush1.msra.mxu0 0.0
    %1360 = vmatprep.subr.mxu0 0.0
    %1361 = vmatpush1.msra.mxu0 0.0
    %1362 = vmatprep.subr.mxu0 0.0
    %1363 = vmatpush1.msra.mxu0 0.0
    %1364 = vmatprep.subr.mxu0 0.0
    %1365 = vmatpush1.msra.mxu0 0.0
    %1366 = vmatprep.subr.mxu0 0.0
    %1367 = vmatpush1.msra.mxu0 0.0
    %1368 = vmatprep.subr.mxu0 0.0
    %1369 = vmatpush1.msra.mxu0 0.0
    %1370 = vmatprep.subr.mxu0 0.0
    %1371 = vmatpush1.msra.mxu0 0.0
    %1372 = vmatprep.subr.mxu0 0.0
    %1373 = vmatpush1.msra.mxu0 0.0
    %1374 = vmatprep.subr.mxu0 0.0
    %1375 = vmatpush1.msra.mxu0 0.0
    %1376 = vmatprep.subr.mxu0 0.0
    %1377 = vmatpush1.msra.mxu0 0.0
    %1378 = vmatprep.subr.mxu0 0.0
    %1379 = vmatpush1.msra.mxu0 0.0
    %1380 = vmatprep.subr.mxu0 0.0
    %1381 = vmatpush1.msra.mxu0 0.0
    %1382 = vmatprep.subr.mxu0 0.0
    %1383 = vmatpush1.msra.mxu0 0.0
    %1384 = vmatprep.subr.mxu0 0.0
    %1385 = vmatpush1.msra.mxu0 0.0
    %1386 = vmatprep.subr.mxu0 0.0
    %1387 = vmatpush1.msra.mxu0 0.0
    %1388 = vmatprep.subr.mxu0 0.0
    %1389 = vmatpush1.msra.mxu0 0.0
    %1390 = vmatprep.subr.mxu0 0.0
    %1391 = vmatpush1.msra.mxu0 0.0
    %1392 = vmatprep.subr.mxu0 0.0
    %1393 = vmatpush1.msra.mxu0 0.0
    %1394 = vmatprep.subr.mxu0 0.0
    %1395 = vmatpush1.msra.mxu0 0.0
    %1396 = vmatprep.mubr.f32.mxu0 0.0
    %1397 = vmatmul.mubr.f32.gmra.mrb[0].mxu0 %v1330
    %v1398 = vpop.f32.mrb[0].mxu0
    %v1399 = vadd.f32 0.0, %v1398
    %v1400 = vpop.f32.mrb[0].mxu0
    %1401 = vdwg.mxu0
    %1402 = vrot.lane.b32.xlu0 %v172, 64
    %v1403 = vpop.permute.xlu0 %1402
    %v1406 = vsel %vm175, %v869, 0
    %1408 = vmatprep.subr.mxu0 0.0
    %1409 = vmatpush1.msra.mxu0 %v1403
    %1410 = vmatprep.subr.mxu0 0.0
    %1411 = vmatpush1.msra.mxu0 0.0
    %1412 = vmatprep.subr.mxu0 0.0
    %1413 = vmatpush1.msra.mxu0 0.0
    %1414 = vmatprep.subr.mxu0 0.0
    %1415 = vmatpush1.msra.mxu0 0.0
    %1416 = vmatprep.subr.mxu0 0.0
    %1417 = vmatpush1.msra.mxu0 0.0
    %1418 = vmatprep.subr.mxu0 0.0
    %1419 = vmatpush1.msra.mxu0 0.0
    %1420 = vmatprep.subr.mxu0 0.0
    %1421 = vmatpush1.msra.mxu0 0.0
    %1422 = vmatprep.subr.mxu0 0.0
    %1423 = vmatpush1.msra.mxu0 0.0
    %1424 = vmatprep.subr.mxu0 0.0
    %1425 = vmatpush1.msra.mxu0 0.0
    %1426 = vmatprep.subr.mxu0 0.0
    %1427 = vmatpush1.msra.mxu0 0.0
    %1428 = vmatprep.subr.mxu0 0.0
    %1429 = vmatpush1.msra.mxu0 0.0
    %1430 = vmatprep.subr.mxu0 0.0
    %1431 = vmatpush1.msra.mxu0 0.0
    %1432 = vmatprep.subr.mxu0 0.0
    %1433 = vmatpush1.msra.mxu0 0.0
    %1434 = vmatprep.subr.mxu0 0.0
    %1435 = vmatpush1.msra.mxu0 0.0
    %1436 = vmatprep.subr.mxu0 0.0
    %1437 = vmatpush1.msra.mxu0 0.0
    %1438 = vmatprep.subr.mxu0 0.0
    %1439 = vmatpush1.msra.mxu0 0.0
    %1440 = vmatprep.subr.mxu0 0.0
    %1441 = vmatpush1.msra.mxu0 0.0
    %1442 = vmatprep.subr.mxu0 0.0
    %1443 = vmatpush1.msra.mxu0 0.0
    %1444 = vmatprep.subr.mxu0 0.0
    %1445 = vmatpush1.msra.mxu0 0.0
    %1446 = vmatprep.subr.mxu0 0.0
    %1447 = vmatpush1.msra.mxu0 0.0
    %1448 = vmatprep.subr.mxu0 0.0
    %1449 = vmatpush1.msra.mxu0 0.0
    %1450 = vmatprep.subr.mxu0 0.0
    %1451 = vmatpush1.msra.mxu0 0.0
    %1452 = vmatprep.subr.mxu0 0.0
    %1453 = vmatpush1.msra.mxu0 0.0
    %1454 = vmatprep.subr.mxu0 0.0
    %1455 = vmatpush1.msra.mxu0 0.0
    %1456 = vmatprep.subr.mxu0 0.0
    %1457 = vmatpush1.msra.mxu0 0.0
    %1458 = vmatprep.subr.mxu0 0.0
    %1459 = vmatpush1.msra.mxu0 0.0
    %1460 = vmatprep.subr.mxu0 0.0
    %1461 = vmatpush1.msra.mxu0 0.0
    %1462 = vmatprep.subr.mxu0 0.0
    %1463 = vmatpush1.msra.mxu0 0.0
    %1464 = vmatprep.subr.mxu0 0.0
    %1465 = vmatpush1.msra.mxu0 0.0
    %1466 = vmatprep.subr.mxu0 0.0
    %1467 = vmatpush1.msra.mxu0 0.0
    %1468 = vmatprep.subr.mxu0 0.0
    %1469 = vmatpush1.msra.mxu0 0.0
    %1470 = vmatprep.subr.mxu0 0.0
    %1471 = vmatpush1.msra.mxu0 0.0
    %1472 = vmatprep.mubr.f32.mxu0 0.0
    %1473 = vmatmul.mubr.f32.gmra.mrb[0].mxu0 %v1406
    %v1474 = vpop.f32.mrb[0].mxu0
    %v1475 = vadd.f32 0.0, %v1474
    %v1476 = vpop.f32.mrb[0].mxu0
    %1477 = vdwg.mxu0
    %v1478 = vld [vmem:[#allocation7] sm:$0xff]
    %s1479 = scalar_lea.vmem [#allocation7], 8
    %v1480 = vld [vmem:[%s1479] sm:$0xff]
    %v1482 = vsel %vm175, %v1095, 0
    %1484 = vmatprep.subr.mxu0 0.0
    %1485 = vmatpush1.msra.mxu0 %v1480
    %1486 = vmatprep.subr.mxu0 0.0
    %1487 = vmatpush1.msra.mxu0 0.0
    %1488 = vmatprep.subr.mxu0 0.0
    %1489 = vmatpush1.msra.mxu0 0.0
    %1490 = vmatprep.subr.mxu0 0.0
    %1491 = vmatpush1.msra.mxu0 0.0
    %1492 = vmatprep.subr.mxu0 0.0
    %1493 = vmatpush1.msra.mxu0 0.0
    %1494 = vmatprep.subr.mxu0 0.0
    %1495 = vmatpush1.msra.mxu0 0.0
    %1496 = vmatprep.subr.mxu0 0.0
    %1497 = vmatpush1.msra.mxu0 0.0
    %1498 = vmatprep.subr.mxu0 0.0
    %1499 = vmatpush1.msra.mxu0 0.0
    %1500 = vmatprep.subr.mxu0 0.0
    %1501 = vmatpush1.msra.mxu0 0.0
    %1502 = vmatprep.subr.mxu0 0.0
    %1503 = vmatpush1.msra.mxu0 0.0
    %1504 = vmatprep.subr.mxu0 0.0
    %1505 = vmatpush1.msra.mxu0 0.0
    %1506 = vmatprep.subr.mxu0 0.0
    %1507 = vmatpush1.msra.mxu0 0.0
    %1508 = vmatprep.subr.mxu0 0.0
    %1509 = vmatpush1.msra.mxu0 0.0
    %1510 = vmatprep.subr.mxu0 0.0
    %1511 = vmatpush1.msra.mxu0 0.0
    %1512 = vmatprep.subr.mxu0 0.0
    %1513 = vmatpush1.msra.mxu0 0.0
    %1514 = vmatprep.subr.mxu0 0.0
    %1515 = vmatpush1.msra.mxu0 0.0
    %1516 = vmatprep.subr.mxu0 0.0
    %1517 = vmatpush1.msra.mxu0 0.0
    %1518 = vmatprep.subr.mxu0 0.0
    %1519 = vmatpush1.msra.mxu0 0.0
    %1520 = vmatprep.subr.mxu0 0.0
    %1521 = vmatpush1.msra.mxu0 0.0
    %1522 = vmatprep.subr.mxu0 0.0
    %1523 = vmatpush1.msra.mxu0 0.0
    %1524 = vmatprep.subr.mxu0 0.0
    %1525 = vmatpush1.msra.mxu0 0.0
    %1526 = vmatprep.subr.mxu0 0.0
    %1527 = vmatpush1.msra.mxu0 0.0
    %1528 = vmatprep.subr.mxu0 0.0
    %1529 = vmatpush1.msra.mxu0 0.0
    %1530 = vmatprep.subr.mxu0 0.0
    %1531 = vmatpush1.msra.mxu0 0.0
    %1532 = vmatprep.subr.mxu0 0.0
    %1533 = vmatpush1.msra.mxu0 0.0
    %1534 = vmatprep.subr.mxu0 0.0
    %1535 = vmatpush1.msra.mxu0 0.0
    %1536 = vmatprep.subr.mxu0 0.0
    %1537 = vmatpush1.msra.mxu0 0.0
    %1538 = vmatprep.subr.mxu0 0.0
    %1539 = vmatpush1.msra.mxu0 0.0
    %1540 = vmatprep.subr.mxu0 0.0
    %1541 = vmatpush1.msra.mxu0 0.0
    %1542 = vmatprep.subr.mxu0 0.0
    %1543 = vmatpush1.msra.mxu0 0.0
    %1544 = vmatprep.subr.mxu0 0.0
    %1545 = vmatpush1.msra.mxu0 0.0
    %1546 = vmatprep.subr.mxu0 0.0
    %1547 = vmatpush1.msra.mxu0 0.0
    %1548 = vmatprep.mubr.f32.mxu0 0.0
    %1549 = vmatmul.mubr.f32.gmra.mrb[0].mxu0 %v1482
    %v1550 = vpop.f32.mrb[0].mxu0
    %v1551 = vadd.f32 0.0, %v1550
    %v1552 = vpop.f32.mrb[0].mxu0
    %1553 = vdwg.mxu0
    %v1555 = vsel %vm175, %v1171, 0
    %1557 = vmatprep.subr.mxu0 0.0
    %1558 = vmatpush1.msra.mxu0 %v1480
    %1559 = vmatprep.subr.mxu0 0.0
    %1560 = vmatpush1.msra.mxu0 0.0
    %1561 = vmatprep.subr.mxu0 0.0
    %1562 = vmatpush1.msra.mxu0 0.0
    %1563 = vmatprep.subr.mxu0 0.0
    %1564 = vmatpush1.msra.mxu0 0.0
    %1565 = vmatprep.subr.mxu0 0.0
    %1566 = vmatpush1.msra.mxu0 0.0
    %1567 = vmatprep.subr.mxu0 0.0
    %1568 = vmatpush1.msra.mxu0 0.0
    %1569 = vmatprep.subr.mxu0 0.0
    %1570 = vmatpush1.msra.mxu0 0.0
    %1571 = vmatprep.subr.mxu0 0.0
    %1572 = vmatpush1.msra.mxu0 0.0
    %1573 = vmatprep.subr.mxu0 0.0
    %1574 = vmatpush1.msra.mxu0 0.0
    %1575 = vmatprep.subr.mxu0 0.0
    %1576 = vmatpush1.msra.mxu0 0.0
    %1577 = vmatprep.subr.mxu0 0.0
    %1578 = vmatpush1.msra.mxu0 0.0
    %1579 = vmatprep.subr.mxu0 0.0
    %1580 = vmatpush1.msra.mxu0 0.0
    %1581 = vmatprep.subr.mxu0 0.0
    %1582 = vmatpush1.msra.mxu0 0.0
    %1583 = vmatprep.subr.mxu0 0.0
    %1584 = vmatpush1.msra.mxu0 0.0
    %1585 = vmatprep.subr.mxu0 0.0
    %1586 = vmatpush1.msra.mxu0 0.0
    %1587 = vmatprep.subr.mxu0 0.0
    %1588 = vmatpush1.msra.mxu0 0.0
    %1589 = vmatprep.subr.mxu0 0.0
    %1590 = vmatpush1.msra.mxu0 0.0
    %1591 = vmatprep.subr.mxu0 0.0
    %1592 = vmatpush1.msra.mxu0 0.0
    %1593 = vmatprep.subr.mxu0 0.0
    %1594 = vmatpush1.msra.mxu0 0.0
    %1595 = vmatprep.subr.mxu0 0.0
    %1596 = vmatpush1.msra.mxu0 0.0
    %1597 = vmatprep.subr.mxu0 0.0
    %1598 = vmatpush1.msra.mxu0 0.0
    %1599 = vmatprep.subr.mxu0 0.0
    %1600 = vmatpush1.msra.mxu0 0.0
    %1601 = vmatprep.subr.mxu0 0.0
    %1602 = vmatpush1.msra.mxu0 0.0
    %1603 = vmatprep.subr.mxu0 0.0
    %1604 = vmatpush1.msra.mxu0 0.0
    %1605 = vmatprep.subr.mxu0 0.0
    %1606 = vmatpush1.msra.mxu0 0.0
    %1607 = vmatprep.subr.mxu0 0.0
    %1608 = vmatpush1.msra.mxu0 0.0
    %1609 = vmatprep.subr.mxu0 0.0
    %1610 = vmatpush1.msra.mxu0 0.0
    %1611 = vmatprep.subr.mxu0 0.0
    %1612 = vmatpush1.msra.mxu0 0.0
    %1613 = vmatprep.subr.mxu0 0.0
    %1614 = vmatpush1.msra.mxu0 0.0
    %1615 = vmatprep.subr.mxu0 0.0
    %1616 = vmatpush1.msra.mxu0 0.0
    %1617 = vmatprep.subr.mxu0 0.0
    %1618 = vmatpush1.msra.mxu0 0.0
    %1619 = vmatprep.subr.mxu0 0.0
    %1620 = vmatpush1.msra.mxu0 0.0
    %1621 = vmatprep.mubr.f32.mxu0 0.0
    %1622 = vmatmul.mubr.f32.gmra.mrb[0].mxu0 %v1555
    %v1623 = vpop.f32.mrb[0].mxu0
    %v1624 = vadd.f32 0.0, %v1623
    %v1625 = vpop.f32.mrb[0].mxu0
    %1626 = vdwg.mxu0
    %v1628 = vsel %vm175, %v943, 0
    %1630 = vmatprep.subr.mxu0 0.0
    %1631 = vmatpush1.msra.mxu0 %v1478
    %1632 = vmatprep.subr.mxu0 0.0
    %1633 = vmatpush1.msra.mxu0 0.0
    %1634 = vmatprep.subr.mxu0 0.0
    %1635 = vmatpush1.msra.mxu0 0.0
    %1636 = vmatprep.subr.mxu0 0.0
    %1637 = vmatpush1.msra.mxu0 0.0
    %1638 = vmatprep.subr.mxu0 0.0
    %1639 = vmatpush1.msra.mxu0 0.0
    %1640 = vmatprep.subr.mxu0 0.0
    %1641 = vmatpush1.msra.mxu0 0.0
    %1642 = vmatprep.subr.mxu0 0.0
    %1643 = vmatpush1.msra.mxu0 0.0
    %1644 = vmatprep.subr.mxu0 0.0
    %1645 = vmatpush1.msra.mxu0 0.0
    %1646 = vmatprep.subr.mxu0 0.0
    %1647 = vmatpush1.msra.mxu0 0.0
    %1648 = vmatprep.subr.mxu0 0.0
    %1649 = vmatpush1.msra.mxu0 0.0
    %1650 = vmatprep.subr.mxu0 0.0
    %1651 = vmatpush1.msra.mxu0 0.0
    %1652 = vmatprep.subr.mxu0 0.0
    %1653 = vmatpush1.msra.mxu0 0.0
    %1654 = vmatprep.subr.mxu0 0.0
    %1655 = vmatpush1.msra.mxu0 0.0
    %1656 = vmatprep.subr.mxu0 0.0
    %1657 = vmatpush1.msra.mxu0 0.0
    %1658 = vmatprep.subr.mxu0 0.0
    %1659 = vmatpush1.msra.mxu0 0.0
    %1660 = vmatprep.subr.mxu0 0.0
    %1661 = vmatpush1.msra.mxu0 0.0
    %1662 = vmatprep.subr.mxu0 0.0
    %1663 = vmatpush1.msra.mxu0 0.0
    %1664 = vmatprep.subr.mxu0 0.0
    %1665 = vmatpush1.msra.mxu0 0.0
    %1666 = vmatprep.subr.mxu0 0.0
    %1667 = vmatpush1.msra.mxu0 0.0
    %1668 = vmatprep.subr.mxu0 0.0
    %1669 = vmatpush1.msra.mxu0 0.0
    %1670 = vmatprep.subr.mxu0 0.0
    %1671 = vmatpush1.msra.mxu0 0.0
    %1672 = vmatprep.subr.mxu0 0.0
    %1673 = vmatpush1.msra.mxu0 0.0
    %1674 = vmatprep.subr.mxu0 0.0
    %1675 = vmatpush1.msra.mxu0 0.0
    %1676 = vmatprep.subr.mxu0 0.0
    %1677 = vmatpush1.msra.mxu0 0.0
    %1678 = vmatprep.subr.mxu0 0.0
    %1679 = vmatpush1.msra.mxu0 0.0
    %1680 = vmatprep.subr.mxu0 0.0
    %1681 = vmatpush1.msra.mxu0 0.0
    %1682 = vmatprep.subr.mxu0 0.0
    %1683 = vmatpush1.msra.mxu0 0.0
    %1684 = vmatprep.subr.mxu0 0.0
    %1685 = vmatpush1.msra.mxu0 0.0
    %1686 = vmatprep.subr.mxu0 0.0
    %1687 = vmatpush1.msra.mxu0 0.0
    %1688 = vmatprep.subr.mxu0 0.0
    %1689 = vmatpush1.msra.mxu0 0.0
    %1690 = vmatprep.subr.mxu0 0.0
    %1691 = vmatpush1.msra.mxu0 0.0
    %1692 = vmatprep.subr.mxu0 0.0
    %1693 = vmatpush1.msra.mxu0 0.0
    %1694 = vmatprep.mubr.f32.mxu0 0.0
    %1695 = vmatmul.mubr.f32.gmra.mrb[0].mxu0 %v1628
    %v1696 = vpop.f32.mrb[0].mxu0
    %v1697 = vadd.f32 %v1551, %v1696
    %v1698 = vpop.f32.mrb[0].mxu0
    %1699 = vdwg.mxu0
    %v1701 = vsel %vm175, %v1019, 0
    %1703 = vmatprep.subr.mxu0 0.0
    %1704 = vmatpush1.msra.mxu0 %v1478
    %1705 = vmatprep.subr.mxu0 0.0
    %1706 = vmatpush1.msra.mxu0 0.0
    %1707 = vmatprep.subr.mxu0 0.0
    %1708 = vmatpush1.msra.mxu0 0.0
    %1709 = vmatprep.subr.mxu0 0.0
    %1710 = vmatpush1.msra.mxu0 0.0
    %1711 = vmatprep.subr.mxu0 0.0
    %1712 = vmatpush1.msra.mxu0 0.0
    %1713 = vmatprep.subr.mxu0 0.0
    %1714 = vmatpush1.msra.mxu0 0.0
    %1715 = vmatprep.subr.mxu0 0.0
    %1716 = vmatpush1.msra.mxu0 0.0
    %1717 = vmatprep.subr.mxu0 0.0
    %1718 = vmatpush1.msra.mxu0 0.0
    %1719 = vmatprep.subr.mxu0 0.0
    %1720 = vmatpush1.msra.mxu0 0.0
    %1721 = vmatprep.subr.mxu0 0.0
    %1722 = vmatpush1.msra.mxu0 0.0
    %1723 = vmatprep.subr.mxu0 0.0
    %1724 = vmatpush1.msra.mxu0 0.0
    %1725 = vmatprep.subr.mxu0 0.0
    %1726 = vmatpush1.msra.mxu0 0.0
    %1727 = vmatprep.subr.mxu0 0.0
    %1728 = vmatpush1.msra.mxu0 0.0
    %1729 = vmatprep.subr.mxu0 0.0
    %1730 = vmatpush1.msra.mxu0 0.0
    %1731 = vmatprep.subr.mxu0 0.0
    %1732 = vmatpush1.msra.mxu0 0.0
    %1733 = vmatprep.subr.mxu0 0.0
    %1734 = vmatpush1.msra.mxu0 0.0
    %1735 = vmatprep.subr.mxu0 0.0
    %1736 = vmatpush1.msra.mxu0 0.0
    %1737 = vmatprep.subr.mxu0 0.0
    %1738 = vmatpush1.msra.mxu0 0.0
    %1739 = vmatprep.subr.mxu0 0.0
    %1740 = vmatpush1.msra.mxu0 0.0
    %1741 = vmatprep.subr.mxu0 0.0
    %1742 = vmatpush1.msra.mxu0 0.0
    %1743 = vmatprep.subr.mxu0 0.0
    %1744 = vmatpush1.msra.mxu0 0.0
    %1745 = vmatprep.subr.mxu0 0.0
    %1746 = vmatpush1.msra.mxu0 0.0
    %1747 = vmatprep.subr.mxu0 0.0
    %1748 = vmatpush1.msra.mxu0 0.0
    %1749 = vmatprep.subr.mxu0 0.0
    %1750 = vmatpush1.msra.mxu0 0.0
    %1751 = vmatprep.subr.mxu0 0.0
    %1752 = vmatpush1.msra.mxu0 0.0
    %1753 = vmatprep.subr.mxu0 0.0
    %1754 = vmatpush1.msra.mxu0 0.0
    %1755 = vmatprep.subr.mxu0 0.0
    %1756 = vmatpush1.msra.mxu0 0.0
    %1757 = vmatprep.subr.mxu0 0.0
    %1758 = vmatpush1.msra.mxu0 0.0
    %1759 = vmatprep.subr.mxu0 0.0
    %1760 = vmatpush1.msra.mxu0 0.0
    %1761 = vmatprep.subr.mxu0 0.0
    %1762 = vmatpush1.msra.mxu0 0.0
    %1763 = vmatprep.subr.mxu0 0.0
    %1764 = vmatpush1.msra.mxu0 0.0
    %1765 = vmatprep.subr.mxu0 0.0
    %1766 = vmatpush1.msra.mxu0 0.0
    %1767 = vmatprep.mubr.f32.mxu0 0.0
    %1768 = vmatmul.mubr.f32.gmra.mrb[0].mxu0 %v1701
    %v1769 = vpop.f32.mrb[0].mxu0
    %v1770 = vadd.f32 %v1624, %v1769
    %v1771 = vpop.f32.mrb[0].mxu0
    %1772 = vdwg.mxu0
    %v1773 = vadd.f32 %v862, %v864
    %v1774 = vadd.f32 %v863, %v865
    %s1775 = scalar_lea.vmem [#allocation7], 16
    %v1776 = vld [vmem:[%s1775] sm:$0xff]
    %v1778 = vsel %vm175, %v1247, 0
    %1780 = vmatprep.subr.mxu0 0.0
    %1781 = vmatpush1.msra.mxu0 %v1776
    %1782 = vmatprep.subr.mxu0 0.0
    %1783 = vmatpush1.msra.mxu0 0.0
    %1784 = vmatprep.subr.mxu0 0.0
    %1785 = vmatpush1.msra.mxu0 0.0
    %1786 = vmatprep.subr.mxu0 0.0
    %1787 = vmatpush1.msra.mxu0 0.0
    %1788 = vmatprep.subr.mxu0 0.0
    %1789 = vmatpush1.msra.mxu0 0.0
    %1790 = vmatprep.subr.mxu0 0.0
    %1791 = vmatpush1.msra.mxu0 0.0
    %1792 = vmatprep.subr.mxu0 0.0
    %1793 = vmatpush1.msra.mxu0 0.0
    %1794 = vmatprep.subr.mxu0 0.0
    %1795 = vmatpush1.msra.mxu0 0.0
    %1796 = vmatprep.subr.mxu0 0.0
    %1797 = vmatpush1.msra.mxu0 0.0
    %1798 = vmatprep.subr.mxu0 0.0
    %1799 = vmatpush1.msra.mxu0 0.0
    %1800 = vmatprep.subr.mxu0 0.0
    %1801 = vmatpush1.msra.mxu0 0.0
    %1802 = vmatprep.subr.mxu0 0.0
    %1803 = vmatpush1.msra.mxu0 0.0
    %1804 = vmatprep.subr.mxu0 0.0
    %1805 = vmatpush1.msra.mxu0 0.0
    %1806 = vmatprep.subr.mxu0 0.0
    %1807 = vmatpush1.msra.mxu0 0.0
    %1808 = vmatprep.subr.mxu0 0.0
    %1809 = vmatpush1.msra.mxu0 0.0
    %1810 = vmatprep.subr.mxu0 0.0
    %1811 = vmatpush1.msra.mxu0 0.0
    %1812 = vmatprep.subr.mxu0 0.0
    %1813 = vmatpush1.msra.mxu0 0.0
    %1814 = vmatprep.subr.mxu0 0.0
    %1815 = vmatpush1.msra.mxu0 0.0
    %1816 = vmatprep.subr.mxu0 0.0
    %1817 = vmatpush1.msra.mxu0 0.0
    %1818 = vmatprep.subr.mxu0 0.0
    %1819 = vmatpush1.msra.mxu0 0.0
    %1820 = vmatprep.subr.mxu0 0.0
    %1821 = vmatpush1.msra.mxu0 0.0
    %1822 = vmatprep.subr.mxu0 0.0
    %1823 = vmatpush1.msra.mxu0 0.0
    %1824 = vmatprep.subr.mxu0 0.0
    %1825 = vmatpush1.msra.mxu0 0.0
    %1826 = vmatprep.subr.mxu0 0.0
    %1827 = vmatpush1.msra.mxu0 0.0
    %1828 = vmatprep.subr.mxu0 0.0
    %1829 = vmatpush1.msra.mxu0 0.0
    %1830 = vmatprep.subr.mxu0 0.0
    %1831 = vmatpush1.msra.mxu0 0.0
    %1832 = vmatprep.subr.mxu0 0.0
    %1833 = vmatpush1.msra.mxu0 0.0
    %1834 = vmatprep.subr.mxu0 0.0
    %1835 = vmatpush1.msra.mxu0 0.0
    %1836 = vmatprep.subr.mxu0 0.0
    %1837 = vmatpush1.msra.mxu0 0.0
    %1838 = vmatprep.subr.mxu0 0.0
    %1839 = vmatpush1.msra.mxu0 0.0
    %1840 = vmatprep.subr.mxu0 0.0
    %1841 = vmatpush1.msra.mxu0 0.0
    %1842 = vmatprep.subr.mxu0 0.0
    %1843 = vmatpush1.msra.mxu0 0.0
    %1844 = vmatprep.mubr.f32.mxu0 0.0
    %1845 = vmatmul.mubr.f32.gmra.mrb[0].mxu0 %v1778
    %v1846 = vpop.f32.mrb[0].mxu0
    %v1847 = vadd.f32 0.0, %v1846
    %v1848 = vpop.f32.mrb[0].mxu0
    %1849 = vdwg.mxu0
    %v1851 = vsel %vm175, %v1323, 0
    %1853 = vmatprep.subr.mxu0 0.0
    %1854 = vmatpush1.msra.mxu0 %v1776
    %1855 = vmatprep.subr.mxu0 0.0
    %1856 = vmatpush1.msra.mxu0 0.0
    %1857 = vmatprep.subr.mxu0 0.0
    %1858 = vmatpush1.msra.mxu0 0.0
    %1859 = vmatprep.subr.mxu0 0.0
    %1860 = vmatpush1.msra.mxu0 0.0
    %1861 = vmatprep.subr.mxu0 0.0
    %1862 = vmatpush1.msra.mxu0 0.0
    %1863 = vmatprep.subr.mxu0 0.0
    %1864 = vmatpush1.msra.mxu0 0.0
    %1865 = vmatprep.subr.mxu0 0.0
    %1866 = vmatpush1.msra.mxu0 0.0
    %1867 = vmatprep.subr.mxu0 0.0
    %1868 = vmatpush1.msra.mxu0 0.0
    %1869 = vmatprep.subr.mxu0 0.0
    %1870 = vmatpush1.msra.mxu0 0.0
    %1871 = vmatprep.subr.mxu0 0.0
    %1872 = vmatpush1.msra.mxu0 0.0
    %1873 = vmatprep.subr.mxu0 0.0
    %1874 = vmatpush1.msra.mxu0 0.0
    %1875 = vmatprep.subr.mxu0 0.0
    %1876 = vmatpush1.msra.mxu0 0.0
    %1877 = vmatprep.subr.mxu0 0.0
    %1878 = vmatpush1.msra.mxu0 0.0
    %1879 = vmatprep.subr.mxu0 0.0
    %1880 = vmatpush1.msra.mxu0 0.0
    %1881 = vmatprep.subr.mxu0 0.0
    %1882 = vmatpush1.msra.mxu0 0.0
    %1883 = vmatprep.subr.mxu0 0.0
    %1884 = vmatpush1.msra.mxu0 0.0
    %1885 = vmatprep.subr.mxu0 0.0
    %1886 = vmatpush1.msra.mxu0 0.0
    %1887 = vmatprep.subr.mxu0 0.0
    %1888 = vmatpush1.msra.mxu0 0.0
    %1889 = vmatprep.subr.mxu0 0.0
    %1890 = vmatpush1.msra.mxu0 0.0
    %1891 = vmatprep.subr.mxu0 0.0
    %1892 = vmatpush1.msra.mxu0 0.0
    %1893 = vmatprep.subr.mxu0 0.0
    %1894 = vmatpush1.msra.mxu0 0.0
    %1895 = vmatprep.subr.mxu0 0.0
    %1896 = vmatpush1.msra.mxu0 0.0
    %1897 = vmatprep.subr.mxu0 0.0
    %1898 = vmatpush1.msra.mxu0 0.0
    %1899 = vmatprep.subr.mxu0 0.0
    %1900 = vmatpush1.msra.mxu0 0.0
    %1901 = vmatprep.subr.mxu0 0.0
    %1902 = vmatpush1.msra.mxu0 0.0
    %1903 = vmatprep.subr.mxu0 0.0
    %1904 = vmatpush1.msra.mxu0 0.0
    %1905 = vmatprep.subr.mxu0 0.0
    %1906 = vmatpush1.msra.mxu0 0.0
    %1907 = vmatprep.subr.mxu0 0.0
    %1908 = vmatpush1.msra.mxu0 0.0
    %1909 = vmatprep.subr.mxu0 0.0
    %1910 = vmatpush1.msra.mxu0 0.0
    %1911 = vmatprep.subr.mxu0 0.0
    %1912 = vmatpush1.msra.mxu0 0.0
    %1913 = vmatprep.subr.mxu0 0.0
    %1914 = vmatpush1.msra.mxu0 0.0
    %1915 = vmatprep.subr.mxu0 0.0
    %1916 = vmatpush1.msra.mxu0 0.0
    %1917 = vmatprep.mubr.f32.mxu0 0.0
    %1918 = vmatmul.mubr.f32.gmra.mrb[0].mxu0 %v1851
    %v1919 = vpop.f32.mrb[0].mxu0
    %v1920 = vadd.f32 0.0, %v1919
    %v1921 = vpop.f32.mrb[0].mxu0
    %1922 = vdwg.mxu0
    %v1923 = vadd.f32 %v1697, %v1847
    %v1924 = vadd.f32 %v1770, %v1920
    %v1925 = vadd.f32 %v1773, %v866
    %v1926 = vadd.f32 %v1774, %v867
    %s1927 = scalar_lea.vmem [#allocation7], 24
    %v1928 = vld [vmem:[%s1927] sm:$0xff]
    %v1930 = vsel %vm175, %v1399, 0
    %1932 = vmatprep.subr.mxu0 0.0
    %1933 = vmatpush1.msra.mxu0 %v1928
    %1934 = vmatprep.subr.mxu0 0.0
    %1935 = vmatpush1.msra.mxu0 0.0
    %1936 = vmatprep.subr.mxu0 0.0
    %1937 = vmatpush1.msra.mxu0 0.0
    %1938 = vmatprep.subr.mxu0 0.0
    %1939 = vmatpush1.msra.mxu0 0.0
    %1940 = vmatprep.subr.mxu0 0.0
    %1941 = vmatpush1.msra.mxu0 0.0
    %1942 = vmatprep.subr.mxu0 0.0
    %1943 = vmatpush1.msra.mxu0 0.0
    %1944 = vmatprep.subr.mxu0 0.0
    %1945 = vmatpush1.msra.mxu0 0.0
    %1946 = vmatprep.subr.mxu0 0.0
    %1947 = vmatpush1.msra.mxu0 0.0
    %1948 = vmatprep.subr.mxu0 0.0
    %1949 = vmatpush1.msra.mxu0 0.0
    %1950 = vmatprep.subr.mxu0 0.0
    %1951 = vmatpush1.msra.mxu0 0.0
    %1952 = vmatprep.subr.mxu0 0.0
    %1953 = vmatpush1.msra.mxu0 0.0
    %1954 = vmatprep.subr.mxu0 0.0
    %1955 = vmatpush1.msra.mxu0 0.0
    %1956 = vmatprep.subr.mxu0 0.0
    %1957 = vmatpush1.msra.mxu0 0.0
    %1958 = vmatprep.subr.mxu0 0.0
    %1959 = vmatpush1.msra.mxu0 0.0
    %1960 = vmatprep.subr.mxu0 0.0
    %1961 = vmatpush1.msra.mxu0 0.0
    %1962 = vmatprep.subr.mxu0 0.0
    %1963 = vmatpush1.msra.mxu0 0.0
    %1964 = vmatprep.subr.mxu0 0.0
    %1965 = vmatpush1.msra.mxu0 0.0
    %1966 = vmatprep.subr.mxu0 0.0
    %1967 = vmatpush1.msra.mxu0 0.0
    %1968 = vmatprep.subr.mxu0 0.0
    %1969 = vmatpush1.msra.mxu0 0.0
    %1970 = vmatprep.subr.mxu0 0.0
    %1971 = vmatpush1.msra.mxu0 0.0
    %1972 = vmatprep.subr.mxu0 0.0
    %1973 = vmatpush1.msra.mxu0 0.0
    %1974 = vmatprep.subr.mxu0 0.0
    %1975 = vmatpush1.msra.mxu0 0.0
    %1976 = vmatprep.subr.mxu0 0.0
    %1977 = vmatpush1.msra.mxu0 0.0
    %1978 = vmatprep.subr.mxu0 0.0
    %1979 = vmatpush1.msra.mxu0 0.0
    %1980 = vmatprep.subr.mxu0 0.0
    %1981 = vmatpush1.msra.mxu0 0.0
    %1982 = vmatprep.subr.mxu0 0.0
    %1983 = vmatpush1.msra.mxu0 0.0
    %1984 = vmatprep.subr.mxu0 0.0
    %1985 = vmatpush1.msra.mxu0 0.0
    %1986 = vmatprep.subr.mxu0 0.0
    %1987 = vmatpush1.msra.mxu0 0.0
    %1988 = vmatprep.subr.mxu0 0.0
    %1989 = vmatpush1.msra.mxu0 0.0
    %1990 = vmatprep.subr.mxu0 0.0
    %1991 = vmatpush1.msra.mxu0 0.0
    %1992 = vmatprep.subr.mxu0 0.0
    %1993 = vmatpush1.msra.mxu0 0.0
    %1994 = vmatprep.subr.mxu0 0.0
    %1995 = vmatpush1.msra.mxu0 0.0
    %1996 = vmatprep.mubr.f32.mxu0 0.0
    %1997 = vmatmul.mubr.f32.gmra.mrb[0].mxu0 %v1930
    %v1998 = vpop.f32.mrb[0].mxu0
    %v1999 = vadd.f32 0.0, %v1998
    %v2000 = vpop.f32.mrb[0].mxu0
    %2001 = vdwg.mxu0
    %v2003 = vsel %vm175, %v1475, 0
    %2005 = vmatprep.subr.mxu0 0.0
    %2006 = vmatpush1.msra.mxu0 %v1928
    %2007 = vmatprep.subr.mxu0 0.0
    %2008 = vmatpush1.msra.mxu0 0.0
    %2009 = vmatprep.subr.mxu0 0.0
    %2010 = vmatpush1.msra.mxu0 0.0
    %2011 = vmatprep.subr.mxu0 0.0
    %2012 = vmatpush1.msra.mxu0 0.0
    %2013 = vmatprep.subr.mxu0 0.0
    %2014 = vmatpush1.msra.mxu0 0.0
    %2015 = vmatprep.subr.mxu0 0.0
    %2016 = vmatpush1.msra.mxu0 0.0
    %2017 = vmatprep.subr.mxu0 0.0
    %2018 = vmatpush1.msra.mxu0 0.0
    %2019 = vmatprep.subr.mxu0 0.0
    %2020 = vmatpush1.msra.mxu0 0.0
    %2021 = vmatprep.subr.mxu0 0.0
    %2022 = vmatpush1.msra.mxu0 0.0
    %2023 = vmatprep.subr.mxu0 0.0
    %2024 = vmatpush1.msra.mxu0 0.0
    %2025 = vmatprep.subr.mxu0 0.0
    %2026 = vmatpush1.msra.mxu0 0.0
    %2027 = vmatprep.subr.mxu0 0.0
    %2028 = vmatpush1.msra.mxu0 0.0
    %2029 = vmatprep.subr.mxu0 0.0
    %2030 = vmatpush1.msra.mxu0 0.0
    %2031 = vmatprep.subr.mxu0 0.0
    %2032 = vmatpush1.msra.mxu0 0.0
    %2033 = vmatprep.subr.mxu0 0.0
    %2034 = vmatpush1.msra.mxu0 0.0
    %2035 = vmatprep.subr.mxu0 0.0
    %2036 = vmatpush1.msra.mxu0 0.0
    %2037 = vmatprep.subr.mxu0 0.0
    %2038 = vmatpush1.msra.mxu0 0.0
    %2039 = vmatprep.subr.mxu0 0.0
    %2040 = vmatpush1.msra.mxu0 0.0
    %2041 = vmatprep.subr.mxu0 0.0
    %2042 = vmatpush1.msra.mxu0 0.0
    %2043 = vmatprep.subr.mxu0 0.0
    %2044 = vmatpush1.msra.mxu0 0.0
    %2045 = vmatprep.subr.mxu0 0.0
    %2046 = vmatpush1.msra.mxu0 0.0
    %2047 = vmatprep.subr.mxu0 0.0
    %2048 = vmatpush1.msra.mxu0 0.0
    %2049 = vmatprep.subr.mxu0 0.0
    %2050 = vmatpush1.msra.mxu0 0.0
    %2051 = vmatprep.subr.mxu0 0.0
    %2052 = vmatpush1.msra.mxu0 0.0
    %2053 = vmatprep.subr.mxu0 0.0
    %2054 = vmatpush1.msra.mxu0 0.0
    %2055 = vmatprep.subr.mxu0 0.0
    %2056 = vmatpush1.msra.mxu0 0.0
    %2057 = vmatprep.subr.mxu0 0.0
    %2058 = vmatpush1.msra.mxu0 0.0
    %2059 = vmatprep.subr.mxu0 0.0
    %2060 = vmatpush1.msra.mxu0 0.0
    %2061 = vmatprep.subr.mxu0 0.0
    %2062 = vmatpush1.msra.mxu0 0.0
    %2063 = vmatprep.subr.mxu0 0.0
    %2064 = vmatpush1.msra.mxu0 0.0
    %2065 = vmatprep.subr.mxu0 0.0
    %2066 = vmatpush1.msra.mxu0 0.0
    %2067 = vmatprep.subr.mxu0 0.0
    %2068 = vmatpush1.msra.mxu0 0.0
    %2069 = vmatprep.mubr.f32.mxu0 0.0
    %2070 = vmatmul.mubr.f32.gmra.mrb[0].mxu0 %v2003
    %v2071 = vpop.f32.mrb[0].mxu0
    %v2072 = vadd.f32 0.0, %v2071
    %v2073 = vpop.f32.mrb[0].mxu0
    %2074 = vdwg.mxu0
    %v2075 = vadd.f32 %v1923, %v1999
    %v2076 = vadd.f32 %v1924, %v2072
    %v2077 = vadd.f32 %v1925, %v868
    %v2078 = vadd.f32 %v1926, %v869
    %vm2079 = vcmask 261120
    %2080 = vst.msk [vmem:[#allocation8] sm:$0xff] %vm2079, %v2075
    %2081 = vst.msk [vmem:[#allocation8 + $0x8] sm:$0xff] %vm2079, %v2076
    %v2082 = vmul.f32 %v2077, 0.25
    %v2083 = vmul.f32 %v2078, 0.25
    %2084 = vst.msk [vmem:[#allocation9] sm:$0xff] %vm175, %v2082
    %2085 = vst.msk [vmem:[#allocation9 + $0x8] sm:$0xff] %vm175, %v2083
    // Predicated region
    $region30: #{tpu_custom_call.1} parent=1 // pred_check
      _
    $region31: #{tpu_custom_call.1} parent=1 // pred_check_branch
      %2087 = sbr.rel (0) target = $region33
    $region32: #{tpu_custom_call.1} parent=1 // pred_region
      %s2089 = ssub.s32 256, 256
      %2090 = vsyncadd [#allocation4], %s2089
      %s2091 = sshll.u32 [#allocation8], 4
      %s2092 = int_to_ptr.vmem [resolvable:$true] %s2091
      %2097 = dma.vmem_to_hbm [thread:$0]  %s2092, 256, %s4, [#allocation4], 128, 128, 8
    $region33: #{tpu_custom_call.1} parent=1 // pred_fallthru
      _
    // Predicated region
    $region34: #{tpu_custom_call.1} parent=1 // pred_check
      _
    $region35: #{tpu_custom_call.1} parent=1 // pred_check_branch
      %2099 = sbr.rel (0) target = $region37
    $region36: #{tpu_custom_call.1} parent=1 // pred_region
      %s2101 = ssub.s32 256, 256
      %2102 = vsyncadd [#allocation10], %s2101
      %s2103 = sshll.u32 [#allocation9], 4
      %s2104 = int_to_ptr.vmem [resolvable:$true] %s2103
      %2109 = dma.vmem_to_hbm [thread:$0]  %s2104, 256, %s5, [#allocation10], 128, 128, 8
    $region37: #{tpu_custom_call.1} parent=1 // pred_fallthru
      _
    // Predicated region
    $region38: #{tpu_custom_call.1} parent=1 // pred_check
      _
    $region39: #{tpu_custom_call.1} parent=1 // pred_check_branch
      %2111 = sbr.rel (0) target = $region41
    $region40: #{tpu_custom_call.1} parent=1 // pred_region
      %2112 = dma.done [#allocation4], 256
    $region41: #{tpu_custom_call.1} parent=1 // pred_fallthru
      _
    // Predicated region
    $region42: #{tpu_custom_call.1} parent=1 // pred_check
      _
    $region43: #{tpu_custom_call.1} parent=1 // pred_check_branch
      %2114 = sbr.rel (0) target = $region45
    $region44: #{tpu_custom_call.1} parent=1 // pred_region
      %2115 = dma.done [#allocation10], 256
    $region45: #{tpu_custom_call.1} parent=1 // pred_fallthru
      _
    %2116 = vsyncpa [#allocation3], 1
    %2117 = vsyncpa [#allocation6], 1
    %2118 = vsyncpa [#allocation4], 1
    %2119 = vsyncpa [#allocation10], 1

</llo_original>
